<compile_context>
chip_gen: v5e
topology: v5e:2x2
jax: 0.10.0
libtpu: 0.0.40
codegen_flags: <defaults>
</compile_context>

<pallas_src>
import functools

import jax
import jax.numpy as jnp
from jax.experimental import pallas as pl
from jax.experimental.pallas import tpu as pltpu


def mul_conv1x1_kernel(x_ref, s_ref, w_ref, o_ref, *, scale_on_weight):
    """One (batch, O-tile, HW-tile) step of conv1x1(scale * x).

    x_ref: (C, T)            f32 activations (one batch element, one HW tile)
    s_ref: (C, 1) or (1, C)  f32 per-channel scale
    w_ref: (Ot, C)           bf16 1x1-conv weight tile
    o_ref: (Ot, T)           output tile
    """
    if scale_on_weight:
        # Fold the scale into the (small) weight tile: Ot*C VPU mults, and x
        # feeds the MXU straight from its input buffer.
        w_scaled = (w_ref[...].astype(jnp.float32) * s_ref[...]).astype(jnp.bfloat16)
        x_b = x_ref[...].astype(jnp.bfloat16)
        acc = jnp.dot(w_scaled, x_b, preferred_element_type=jnp.float32)
    else:
        # Fold the scale into the activations: C*T VPU mults (cheaper when the
        # HW tile is smaller than the O tile, e.g. the 7x7 SE tail).
        x_scaled = (x_ref[...] * s_ref[...]).astype(jnp.bfloat16)
        acc = jnp.dot(w_ref[...], x_scaled, preferred_element_type=jnp.float32)
    o_ref[...] = acc.astype(o_ref.dtype)


def _pick_tile_hw(hw: int, c: int, o: int) -> int:
    """128-aligned HW tile with a cdiv grid; full-extent block only for tiny HW."""
    if hw <= 256:
        return hw                      # 7x7 / 14x14: one full (lane-padded) block
    budget = 12 * 1024 * 1024          # bytes for the double-buffered x + out blocks
    tile = 128
    for t in (128, 256, 512, 1024, 2048):
        if t > hw:
            break
        if 2 * t * 4 * (c + o) <= budget:
            tile = t
    return tile


def _pick_tile_o(o: int, other_steps: int) -> int:
    """Split output channels when the rest of the grid has <2 parallel steps.

    Gives v7x's two TensorCores something to shard (each core DMAs only its
    weight slice); costs only ~0.35 us of grid overhead on single-TC v5e/v6e.
    """
    if other_steps >= 2 or o < 16 or o % 16 != 0:
        return o
    return o // 2


def mul_conv2d_1x1(x_nchw, scale_1c11, weight_oc11):
    """Conv2d(1x1, stride 1, bias=False)(scale * x), PyTorch NCHW semantics."""
    N, C, H, W = x_nchw.shape
    O = weight_oc11.shape[0]
    HW = H * W

    # Free reshapes of contiguous memory (no transposes / HBM copies).
    x_mat = x_nchw.reshape(N, C, HW)                         # (N, C, HW)  f32
    w_mat = weight_oc11.reshape(O, C).astype(jnp.bfloat16)   # bf16: halves weight DMA

    tile_hw = _pick_tile_hw(HW, C, O)
    hw_steps = pl.cdiv(HW, tile_hw)
    tile_o = _pick_tile_o(O, N * hw_steps)
    o_steps = O // tile_o
    grid = (N, o_steps, hw_steps)

    # Put the per-channel scale on whichever operand is cheaper to scale.
    scale_on_weight = tile_o <= tile_hw
    s_mat = scale_1c11.reshape((1, C) if scale_on_weight else (C, 1))

    kernel = functools.partial(mul_conv1x1_kernel, scale_on_weight=scale_on_weight)

    # Explicit VMEM budget from the actual block bytes (don't guess a cap).
    block_bytes = (
        2 * tile_hw * 4 * (C + tile_o)     # x + out blocks, double-buffered, f32
        + 2 * tile_o * C * 2               # bf16 weight (<= 2 buffers)
        + 2 * max(C, 128) * 4              # scale (lane-padded)
    )
    vmem_limit = int(min(48 * 2**20, max(32 * 2**20, 2 * block_bytes)))

    cost = pl.CostEstimate(
        flops=2 * N * HW * C * O,
        transcendentals=0,
        bytes_accessed=N * C * HW * 4 + O * C * 2 + C * 4 + N * O * HW * 4,
    )
    out_shape = jax.ShapeDtypeStruct((N, O, HW), x_nchw.dtype)
    compiler_params = pltpu.CompilerParams(
        dimension_semantics=("parallel", "parallel", "parallel"),
        vmem_limit_bytes=vmem_limit,
    )

    def run(single_buffer_residents: bool):
        def resident(shape, index_map):
            # Constant index_map -> block never changes; a second buffer is waste.
            if single_buffer_residents:
                return pl.BlockSpec(shape, index_map, pipeline_mode=pl.Buffered(1))
            return pl.BlockSpec(shape, index_map)

        if o_steps == 1:
            # Weight is resident across the whole grid.
            w_spec = resident((tile_o, C), lambda n, o, j: (o, 0))
        else:
            w_spec = pl.BlockSpec((tile_o, C), lambda n, o, j: (o, 0))

        in_specs = [
            # Activations: one (C, tile_hw) slab per step, batch dim squeezed.
            pl.BlockSpec((None, C, tile_hw), lambda n, o, j: (n, 0, j)),
            # Scale: resident in VMEM.
            resident(s_mat.shape, lambda n, o, j: (0, 0)),
            # Weight tile (bf16).
            w_spec,
        ]
        out_specs = pl.BlockSpec((None, tile_o, tile_hw), lambda n, o, j: (n, o, j))

        return pl.pallas_call(
            kernel,
            out_shape=out_shape,
            grid=grid,
            in_specs=in_specs,
            out_specs=out_specs,
            compiler_params=compiler_params,
            cost_estimate=cost,
        )(x_mat, s_mat, w_mat)

    try:
        out = run(True)
    except Exception:
        # pipeline_mode=pl.Buffered(1) not supported by this Pallas version; the
        # only cost of falling back is one redundant buffer for the resident
        # scale/weight blocks.
        out = run(False)

    return out.reshape(N, O, H, W)     # free reshape back to NCHW


def _reference(x_nchw, scale_1c11, weight_oc11):
    """Plain-JAX reference mirroring the kernel's bf16 input rounding."""
    xs = (x_nchw * scale_1c11).astype(jnp.bfloat16).astype(jnp.float32)
    w = weight_oc11.reshape(weight_oc11.shape[0], -1).astype(jnp.bfloat16).astype(jnp.float32)
    return jnp.einsum("nchw,oc->nohw", xs, w)


if __name__ == "__main__":
    key = jax.random.PRNGKey(0)
    k1, k2, k3, k4, k5, k6 = jax.random.split(key, 6)

    # Exact module shapes: x249 (1,672,7,7), x254 (1,672,1,1), Conv2d(672->192, 1x1).
    x249 = jax.random.normal(k1, (1, 672, 7, 7), dtype=jnp.float32)
    x254 = jax.random.normal(k2, (1, 672, 1, 1), dtype=jnp.float32)
    w83 = jax.random.normal(k3, (192, 672, 1, 1), dtype=jnp.float32) * 0.02

    # forward(x254, x249): x255 = x254 * x249; x256 = conv2d83(x255)
    out = jax.block_until_ready(mul_conv2d_1x1(x249, x254, w83))
    assert out.shape == (1, 192, 7, 7), out.shape
    ref = _reference(x249, x254, w83)
    assert jnp.allclose(out, ref, atol=2e-2, rtol=2e-2), float(jnp.max(jnp.abs(out - ref)))

    # Secondary small shape exercising the cdiv/ragged HW tiling, resident bf16
    # weight (single-buffered) and the weight-side scale path.
    xb = jax.random.normal(k4, (1, 64, 18, 18), dtype=jnp.float32)
    sb = jax.random.normal(k5, (1, 64, 1, 1), dtype=jnp.float32)
    wb = jax.random.normal(k6, (32, 64, 1, 1), dtype=jnp.float32) * 0.05
    out2 = jax.block_until_ready(mul_conv2d_1x1(xb, sb, wb))
    assert out2.shape == (1, 32, 18, 18), out2.shape
    ref2 = _reference(xb, sb, wb)
    assert jnp.allclose(out2, ref2, atol=2e-2, rtol=2e-2), float(jnp.max(jnp.abs(out2 - ref2)))

    print("KERNEL_OK")
</pallas_src>

<mosaic_0001>
module attributes {stable_mosaic.version = 11 : i64} {
  func.func @mul_conv1x1_kernel(%arg0: i32, %arg1: i32, %arg2: i32, %arg3: memref<1x672x49xf32, #tpu.memory_space<vmem>>, %arg4: memref<672x1xf32, #tpu.memory_space<vmem>>, %arg5: memref<96x672xbf16, #tpu.memory_space<vmem>>, %arg6: memref<1x96x49xf32, #tpu.memory_space<vmem>>) attributes {dimension_semantics = [#tpu.dimension_semantics<parallel>, #tpu.dimension_semantics<parallel>, #tpu.dimension_semantics<parallel>], iteration_bounds = array<i64: 1, 2, 1>, scalar_prefetch = 0 : i64, scratch_operands = 0 : i64, tpu.core_type = #tpu.core_type<tc>, window_params = [{transform_indices = @transform_0, window_bounds = array<i64: 1, 672, 49>}, {pipeline_mode = #tpu.pipeline_mode<synchronous>, transform_indices = @transform_1, window_bounds = array<i64: 672, 1>}, {transform_indices = @transform_2, window_bounds = array<i64: 96, 672>}, {transform_indices = @transform_3, window_bounds = array<i64: 1, 96, 49>}]} {
    %c0 = arith.constant 0 : index
    %c0_0 = arith.constant 0 : index
    %c0_1 = arith.constant 0 : index
    %0 = vector.load %arg3[%c0, %c0_0, %c0_1] : memref<1x672x49xf32, #tpu.memory_space<vmem>>, vector<1x672x49xf32>
    %1 = vector.shape_cast %0 : vector<1x672x49xf32> to vector<672x49xf32>
    %c0_2 = arith.constant 0 : index
    %c0_3 = arith.constant 0 : index
    %2 = vector.load %arg4[%c0_2, %c0_3] : memref<672x1xf32, #tpu.memory_space<vmem>>, vector<672x1xf32>
    %3 = vector.broadcast %2 : vector<672x1xf32> to vector<672x49xf32>
    %4 = arith.mulf %1, %3 : vector<672x49xf32>
    %5 = arith.truncf %4 : vector<672x49xf32> to vector<672x49xbf16>
    %c0_4 = arith.constant 0 : index
    %c0_5 = arith.constant 0 : index
    %6 = vector.load %arg5[%c0_4, %c0_5] : memref<96x672xbf16, #tpu.memory_space<vmem>>, vector<96x672xbf16>
    %cst = arith.constant dense<0.000000e+00> : vector<96x49xf32>
    %7 = tpu.matmul %6, %5, %cst {dimension_numbers = #tpu.dot_dimension_numbers<[1], [0], [0], [1], [0, 0, 1, 1], [], []>} : vector<96x672xbf16>, vector<672x49xbf16>, vector<96x49xf32> -> vector<96x49xf32>
    %c0_6 = arith.constant 0 : index
    %c0_7 = arith.constant 0 : index
    %c0_8 = arith.constant 0 : index
    %8 = vector.load %arg6[%c0_6, %c0_7, %c0_8] : memref<1x96x49xf32, #tpu.memory_space<vmem>>, vector<1x96x49xf32>
    %9 = vector.shape_cast %8 : vector<1x96x49xf32> to vector<96x49xf32>
    %10 = vector.shape_cast %7 : vector<96x49xf32> to vector<1x96x49xf32>
    tpu.vector_store %arg6[%c0_6, %c0_7, %c0_8], %10 {strides = array<i32>} : memref<1x96x49xf32, #tpu.memory_space<vmem>>, vector<1x96x49xf32>,
    return
  }
  func.func @transform_0(%arg0: i32, %arg1: i32, %arg2: i32) -> (i32, i32, i32) {
    %c0_i32 = arith.constant 0 : i32
    %c0_i32_0 = arith.constant 0 : i32
    return %arg0, %c0_i32, %arg2 : i32, i32, i32
  }
  func.func @transform_1(%arg0: i32, %arg1: i32, %arg2: i32) -> (i32, i32) {
    %c0_i32 = arith.constant 0 : i32
    %c0_i32_0 = arith.constant 0 : i32
    %c0_i32_1 = arith.constant 0 : i32
    return %c0_i32, %c0_i32_0 : i32, i32
  }
  func.func @transform_2(%arg0: i32, %arg1: i32, %arg2: i32) -> (i32, i32) {
    %c0_i32 = arith.constant 0 : i32
    %c0_i32_0 = arith.constant 0 : i32
    return %arg1, %c0_i32 : i32, i32
  }
  func.func @transform_3(%arg0: i32, %arg1: i32, %arg2: i32) -> (i32, i32, i32) {
    %c0_i32 = arith.constant 0 : i32
    return %arg0, %arg1, %arg2 : i32, i32, i32
  }
}

module attributes {stable_mosaic.version = 11 : i64} {
  func.func @mul_conv1x1_kernel(%arg0: i32, %arg1: i32, %arg2: i32, %arg3: memref<1x672x49xf32, #tpu.memory_space<vmem>>, %arg4: memref<672x1xf32, #tpu.memory_space<vmem>>, %arg5: memref<96x672xbf16, #tpu.memory_space<vmem>>, %arg6: memref<1x96x49xf32, #tpu.memory_space<vmem>>) attributes {dimension_semantics = [#tpu.dimension_semantics<parallel>, #tpu.dimension_semantics<parallel>, #tpu.dimension_semantics<parallel>], iteration_bounds = array<i64: 1, 2, 1>, scalar_prefetch = 0 : i64, scratch_operands = 0 : i64, tpu.core_type = #tpu.core_type<tc>, window_params = [{transform_indices = @transform_0, window_bounds = array<i64: 1, 672, 49>}, {pipeline_mode = #tpu.pipeline_mode<synchronous>, transform_indices = @transform_1, window_bounds = array<i64: 672, 1>}, {transform_indices = @transform_2, window_bounds = array<i64: 96, 672>}, {transform_indices = @transform_3, window_bounds = array<i64: 1, 96, 49>}]} {
    %c0 = arith.constant 0 : index
    %c0_0 = arith.constant 0 : index
    %c0_1 = arith.constant 0 : index
    %0 = vector.load %arg3[%c0, %c0_0, %c0_1] : memref<1x672x49xf32, #tpu.memory_space<vmem>>, vector<1x672x49xf32>
    %1 = vector.shape_cast %0 : vector<1x672x49xf32> to vector<672x49xf32>
    %c0_2 = arith.constant 0 : index
    %c0_3 = arith.constant 0 : index
    %2 = vector.load %arg4[%c0_2, %c0_3] : memref<672x1xf32, #tpu.memory_space<vmem>>, vector<672x1xf32>
    %3 = vector.broadcast %2 : vector<672x1xf32> to vector<672x49xf32>
    %4 = arith.mulf %1, %3 : vector<672x49xf32>
    %5 = arith.truncf %4 : vector<672x49xf32> to vector<672x49xbf16>
    %c0_4 = arith.constant 0 : index
    %c0_5 = arith.constant 0 : index
    %6 = vector.load %arg5[%c0_4, %c0_5] : memref<96x672xbf16, #tpu.memory_space<vmem>>, vector<96x672xbf16>
    %cst = arith.constant dense<0.000000e+00> : vector<96x49xf32>
    %7 = tpu.matmul %6, %5, %cst {dimension_numbers = #tpu.dot_dimension_numbers<[1], [0], [0], [1], [0, 0, 1, 1], [], []>} : vector<96x672xbf16>, vector<672x49xbf16>, vector<96x49xf32> -> vector<96x49xf32>
    %c0_6 = arith.constant 0 : index
    %c0_7 = arith.constant 0 : index
    %c0_8 = arith.constant 0 : index
    %8 = vector.load %arg6[%c0_6, %c0_7, %c0_8] : memref<1x96x49xf32, #tpu.memory_space<vmem>>, vector<1x96x49xf32>
    %9 = vector.shape_cast %8 : vector<1x96x49xf32> to vector<96x49xf32>
    %10 = vector.shape_cast %7 : vector<96x49xf32> to vector<1x96x49xf32>
    tpu.vector_store %arg6[%c0_6, %c0_7, %c0_8], %10 {strides = array<i32>} : memref<1x96x49xf32, #tpu.memory_space<vmem>>, vector<1x96x49xf32>,
    return
  }
  func.func @transform_0(%arg0: i32, %arg1: i32, %arg2: i32) -> (i32, i32, i32) {
    %c0_i32 = arith.constant 0 : i32
    %c0_i32_0 = arith.constant 0 : i32
    return %arg0, %c0_i32, %arg2 : i32, i32, i32
  }
  func.func @transform_1(%arg0: i32, %arg1: i32, %arg2: i32) -> (i32, i32) {
    %c0_i32 = arith.constant 0 : i32
    %c0_i32_0 = arith.constant 0 : i32
    %c0_i32_1 = arith.constant 0 : i32
    return %c0_i32, %c0_i32_0 : i32, i32
  }
  func.func @transform_2(%arg0: i32, %arg1: i32, %arg2: i32) -> (i32, i32) {
    %c0_i32 = arith.constant 0 : i32
    %c0_i32_0 = arith.constant 0 : i32
    return %arg1, %c0_i32 : i32, i32
  }
  func.func @transform_3(%arg0: i32, %arg1: i32, %arg2: i32) -> (i32, i32, i32) {
    %c0_i32 = arith.constant 0 : i32
    return %arg0, %arg1, %arg2 : i32, i32, i32
  }
}

</mosaic_0001>

<llo_original>
// kernel: tpu_custom_call.1
$region0: #{tpu_custom_call.1}
  #allocation0 [shape = 'u32[]', space=smem, size = 0x4, offset = 0x4, fixed_abs, tag = 'smem constant byte address 0x4 - core index']
  #allocation1 [shape = 'u32[72,128]{1,0:T(1,128)}', space=vmem, size = 0x9000, scoped, tag = 'internal scratch']
  %s0 = inlined_call_operand.vmem [shape: f32[1,672,49], index: 0, kind: input, shape index: {}]
  %s1 = inlined_call_operand.vmem [shape: f32[672,1], index: 1, kind: input, shape index: {}]
  %s2 = inlined_call_operand.vmem [shape: bf16[192,672], index: 2, kind: input, shape index: {}]
  %s3 = inlined_call_operand.vmem [shape: f32[1,192,49], index: 3, kind: output, shape index: {}]
  %s4 = sld [smem:[#allocation0]]
  $region45: #{tpu_custom_call.1} parent=0
    _
  %s6 = ssub.s32 1, %s4
  %s7 = scalar_select 0, %s6, %s4
  loop: start=0, step=1, limit=4
  $region2: #{tpu_custom_call.1} parent=0 // loop_pre_header
    _
  $region3: #{tpu_custom_call.1} parent=0 // loop_header
    %s9 = sphi 0, %s13
    %p10 = scmp.ge.s32.totalorder %s9, 4
    %s16 = sphi 0, %s35
    %s17 = sphi 0, %s31
    %s18 = sphi 0, %s27
    %s19 = sphi 0, %s16
    %s20 = sphi 0, %s17
    %s21 = sphi 0, %s18
    %s22 = sphi 0, %s19
    %s23 = sphi 0, %s20
    %s24 = sphi 0, %s21
    %s40 = sphi 0, %s42
    %s43 = sphi 0, %s40
    %s44 = sphi 0, %s43
    %s60 = sphi 0, %s44
    %s64 = sphi 0, %s64
    %s66 = sphi 0, %s64
    %s67 = sphi 0, %s66
    %s81 = sphi 0, %s67
    %s87 = sphi 0, %s89
    %s90 = sphi 0, %s87
    %s91 = sphi 0, %s90
    %s107 = sphi 0, %s91
    %s117 = sphi 0, %s119
    %s120 = sphi 0, %s117
    %s121 = sphi 0, %s120
    %s137 = sphi 0, %s121
  $region4: #{tpu_custom_call.1} parent=0 // loop_header_branch
    %12 = sbr.rel (%p10) target = $region8
  $region5: #{tpu_custom_call.1} parent=0 // loop_body
    %s14 = ssub.s32 %s9, 1
    %s15 = ssub.s32 %s9, 2
    %s25 = sadd.s32 1, %s18
    %p26 = scmp.ge.s32.totalorder %s25, 1
    %s27 = scalar_select %p26, 0, %s25
    %s28 = sadd.s32 1, %s17
    %s29 = scalar_select %p26, %s28, %s17
    %p30 = scmp.ge.s32.totalorder %s29, 2
    %s31 = scalar_select %p30, 0, %s29
    %s32 = sadd.s32 1, %s16
    %s33 = scalar_select %p30, %s32, %s16
    %p34 = scmp.ge.s32.totalorder %s33, 1
    %s35 = scalar_select %p34, 0, %s33
    %s36 = ssub.s32 %s16, %s35
    %s37 = ssub.s32 %s18, %s27
    %s38 = sor.u32 %s36, %s37
    %p39 = scmp.eq.s32.totalorder %s38, 0
    %s41 = sadd.s32 %s40, 1
    %s42 = scalar_select %p39, %s40, %s41
    %p45 = pneg %p39
    %p46 = scmp.eq.s32.totalorder %s9, 1
    %p47 = por %p45, %p46
    %p48 = scmp.ne.s32.totalorder %s40, %s43
    %p49 = scmp.eq.s32.totalorder %s9, 0
    %p50 = por %p48, %p49
    %p51 = scmp.ne.s32.totalorder %s40, %s43
    %p52 = scmp.eq.s32.totalorder %s14, 1
    %p53 = por %p51, %p52
    %p54 = scmp.ne.s32.totalorder %s43, %s44
    %p55 = scmp.eq.s32.totalorder %s14, 0
    %p56 = por %p54, %p55
    %p57 = scmp.ne.s32.totalorder %s43, %s44
    %p58 = scmp.eq.s32.totalorder %s15, 1
    %p59 = por %p57, %p58
    %p61 = scmp.ne.s32.totalorder %s44, %s60
    %p62 = scmp.eq.s32.totalorder %s15, 0
    %p63 = por %p61, %p62
    %s65 = sadd.s32 %s64, 1
    %p68 = scmp.eq.s32.totalorder %s9, 1
    %p69 = scmp.ne.s32.totalorder %s64, %s66
    %p70 = scmp.eq.s32.totalorder %s9, 0
    %p71 = por %p69, %p70
    %p72 = scmp.ne.s32.totalorder %s64, %s66
    %p73 = scmp.eq.s32.totalorder %s14, 1
    %p74 = por %p72, %p73
    %p75 = scmp.ne.s32.totalorder %s66, %s67
    %p76 = scmp.eq.s32.totalorder %s14, 0
    %p77 = por %p75, %p76
    %p78 = scmp.ne.s32.totalorder %s66, %s67
    %p79 = scmp.eq.s32.totalorder %s15, 1
    %p80 = por %p78, %p79
    %p82 = scmp.ne.s32.totalorder %s67, %s81
    %p83 = scmp.eq.s32.totalorder %s15, 0
    %p84 = por %p82, %p83
    %s85 = ssub.s32 %s17, %s31
    %p86 = scmp.eq.s32.totalorder %s85, 0
    %s88 = sadd.s32 %s87, 1
    %s89 = scalar_select %p86, %s87, %s88
    %p92 = pneg %p86
    %p93 = scmp.eq.s32.totalorder %s9, 1
    %p94 = por %p92, %p93
    %p95 = scmp.ne.s32.totalorder %s87, %s90
    %p96 = scmp.eq.s32.totalorder %s9, 0
    %p97 = por %p95, %p96
    %p98 = scmp.ne.s32.totalorder %s87, %s90
    %p99 = scmp.eq.s32.totalorder %s14, 1
    %p100 = por %p98, %p99
    %p101 = scmp.ne.s32.totalorder %s90, %s91
    %p102 = scmp.eq.s32.totalorder %s14, 0
    %p103 = por %p101, %p102
    %p104 = scmp.ne.s32.totalorder %s90, %s91
    %p105 = scmp.eq.s32.totalorder %s15, 1
    %p106 = por %p104, %p105
    %p108 = scmp.ne.s32.totalorder %s91, %s107
    %p109 = scmp.eq.s32.totalorder %s15, 0
    %p110 = por %p108, %p109
    %s111 = ssub.s32 %s16, %s35
    %s112 = ssub.s32 %s17, %s31
    %s113 = sor.u32 %s111, %s112
    %s114 = ssub.s32 %s18, %s27
    %s115 = sor.u32 %s113, %s114
    %p116 = scmp.eq.s32.totalorder %s115, 0
    %s118 = sadd.s32 %s117, 1
    %s119 = scalar_select %p116, %s117, %s118
    %p122 = pneg %p116
    %p123 = scmp.eq.s32.totalorder %s9, 1
    %p124 = por %p122, %p123
    %p125 = scmp.ne.s32.totalorder %s117, %s120
    %p126 = scmp.eq.s32.totalorder %s9, 0
    %p127 = por %p125, %p126
    %p128 = scmp.ne.s32.totalorder %s117, %s120
    %p129 = scmp.eq.s32.totalorder %s14, 1
    %p130 = por %p128, %p129
    %p131 = scmp.ne.s32.totalorder %s120, %s121
    %p132 = scmp.eq.s32.totalorder %s14, 0
    %p133 = por %p131, %p132
    %p134 = scmp.ne.s32.totalorder %s120, %s121
    %p135 = scmp.eq.s32.totalorder %s15, 1
    %p136 = por %p134, %p135
    %p138 = scmp.ne.s32.totalorder %s121, %s137
    %p139 = scmp.eq.s32.totalorder %s15, 0
    %p140 = por %p138, %p139
    %p141 = scmp.le.s32.totalorder 1, %s9
    %p142 = scmp.lt.s32.totalorder %s9, 3
    %p143 = pnand %p141, %p142
    %p144 = pneg %p143
    // Predicated region
    $region9: #{tpu_custom_call.1} parent=5 // pred_check
      _
    $region10: #{tpu_custom_call.1} parent=5 // pred_check_branch
      %146 = sbr.rel (%p143) target = $region12
    $region11: #{tpu_custom_call.1} parent=5 // pred_region
      %s147 = ssub.s32 %s9, 1
      // Predicated region
      $region13: #{tpu_custom_call.1} parent=11 // pred_check
        %p148 = pneg %p56
      $region14: #{tpu_custom_call.1} parent=11 // pred_check_branch
        %150 = sbr.rel (%p148) target = $region16
      $region15: #{tpu_custom_call.1} parent=11 // pred_region
        %p151 = scmp.lt.s32.totalorder %s19, 0
        %s152 = scalar_select %p151, %s19, 0
        %p153 = scmp.lt.s32.totalorder %s21, 0
        %s154 = scalar_select %p153, %s21, 0
        %s155 = smul.addr %s152, 84
        %s156 = sadd.s32 %s154, %s155
        %s157 = smul.addr %s156, 8
        %s158 = scalar_lea.vmem %s0, %s157
      $region16: #{tpu_custom_call.1} parent=11 // pred_fallthru
        _
      // Predicated region
      $region17: #{tpu_custom_call.1} parent=11 // pred_check
        %p159 = pneg %p77
      $region18: #{tpu_custom_call.1} parent=11 // pred_check_branch
        %161 = sbr.rel (%p159) target = $region20
      $region19: #{tpu_custom_call.1} parent=11 // pred_region
        _
      $region20: #{tpu_custom_call.1} parent=11 // pred_fallthru
        _
    $region12: #{tpu_custom_call.1} parent=5 // pred_fallthru
      _
    %p162 = scmp.lt.s32.totalorder %s9, 2
    // Predicated region
    $region21: #{tpu_custom_call.1} parent=5 // pred_check
      %p163 = pneg %p162
    $region22: #{tpu_custom_call.1} parent=5 // pred_check_branch
      %165 = sbr.rel (%p163) target = $region24
    $region23: #{tpu_custom_call.1} parent=5 // pred_region
      // Predicated region
      $region25: #{tpu_custom_call.1} parent=23 // pred_check
        %p166 = pneg %p97
      $region26: #{tpu_custom_call.1} parent=23 // pred_check_branch
        %168 = sbr.rel (%p166) target = $region28
      $region27: #{tpu_custom_call.1} parent=23 // pred_region
        %s169 = smul.u32 12, %s17
        %p170 = scmp.lt.s32.totalorder %s169, 23
        %s171 = scalar_select %p170, %s169, 23
        %s172 = smul.addr %s171, 6
        %s173 = smul.addr %s172, 4
        %s174 = scalar_lea.vmem %s2, %s173
        %s175 = smul.u32 12, %s17
      $region28: #{tpu_custom_call.1} parent=23 // pred_fallthru
        _
    $region24: #{tpu_custom_call.1} parent=5 // pred_fallthru
      _
    %p176 = scmp.le.s32.totalorder 1, %s9
    %p177 = scmp.lt.s32.totalorder %s9, 3
    %p178 = pnand %p176, %p177
    %p179 = pneg %p178
    // Predicated region
    $region29: #{tpu_custom_call.1} parent=5 // pred_check
      _
    $region30: #{tpu_custom_call.1} parent=5 // pred_check_branch
      %181 = sbr.rel (%p178) target = $region32
    $region31: #{tpu_custom_call.1} parent=5 // pred_region
      %s182 = ssub.s32 %s9, 1
      %p183 = scmp.lt.s32.totalorder %s19, 0
      %s184 = scalar_select %p183, %s19, 0
      %p185 = scmp.lt.s32.totalorder %s21, 0
      %s186 = scalar_select %p185, %s21, 0
      %s187 = smul.addr %s184, 84
      %s188 = sadd.s32 %s186, %s187
      %s189 = smul.addr %s188, 8
      %s190 = scalar_lea.vmem %s0, %s189
      %p191 = pneg %p56
      %p192 = pneg %p53
      %p193 = pneg %p77
      %p194 = pneg %p74
      %s195 = smul.u32 12, %s20
      %p196 = scmp.lt.s32.totalorder %s195, 23
      %s197 = scalar_select %p196, %s195, 23
      %s198 = smul.addr %s197, 6
      %s199 = smul.addr %s198, 4
      %s200 = scalar_lea.vmem %s2, %s199
      %p201 = pneg %p103
      %p202 = pneg %p100
      %p203 = pneg %p133
      %p204 = pneg %p130
      %s205 = smul.u32 12, %s20
      %p206 = scmp.lt.s32.totalorder %s19, 0
      %s207 = scalar_select %p206, %s19, 0
      %p208 = scmp.lt.s32.totalorder %s205, 23
      %s209 = scalar_select %p208, %s205, 23
      %p210 = scmp.lt.s32.totalorder %s21, 0
      %s211 = scalar_select %p210, %s21, 0
      %s212 = sadd.s32 %s211, %s209
      %s213 = smul.addr %s207, 24
      %s214 = sadd.s32 %s212, %s213
      %s215 = smul.addr %s214, 8
      %s216 = scalar_lea.vmem %s3, %s215
      %p217 = scmp.lt.s32.totalorder %s19, 0
      %s218 = scalar_select %p217, %s19, 0
      %p219 = scmp.lt.s32.totalorder %s21, 0
      %s220 = scalar_select %p219, %s21, 0
      %s221 = smul.addr %s218, 84
      %s222 = sadd.s32 %s220, %s221
      %s223 = smul.addr %s222, 8
      %s224 = scalar_lea.vmem %s0, %s223
      %s225 = smul.u32 12, %s20
      %p226 = scmp.lt.s32.totalorder %s225, 23
      %s227 = scalar_select %p226, %s225, 23
      %s228 = smul.addr %s227, 6
      %s229 = smul.addr %s228, 4
      %s230 = scalar_lea.vmem %s2, %s229
      %s231 = smul.u32 12, %s20
      %s232 = smul.u32 12, %s20
      %p233 = scmp.lt.s32.totalorder %s19, 0
      %s234 = scalar_select %p233, %s19, 0
      %p235 = scmp.lt.s32.totalorder %s232, 23
      %s236 = scalar_select %p235, %s232, 23
      %p237 = scmp.lt.s32.totalorder %s21, 0
      %s238 = scalar_select %p237, %s21, 0
      %s239 = sadd.s32 %s238, %s236
      %s240 = smul.addr %s234, 24
      %s241 = sadd.s32 %s239, %s240
      %s242 = smul.addr %s241, 8
      %s243 = scalar_lea.vmem %s3, %s242
      %s244 = smul.u32 12, %s20
      %v246 = vld [vmem:[%s224] sm:$0xff]
      %v247 = vld [vmem:[%s224 + $0x8] sm:$0xff]
      %v248 = vld [vmem:[%s224 + $0x10] sm:$0xff]
      %v249 = vld [vmem:[%s224 + $0x18] sm:$0xff]
      %v250 = vld [vmem:[%s224 + $0x20] sm:$0xff]
      %v251 = vld [vmem:[%s224 + $0x28] sm:$0xff]
      %v252 = vld [vmem:[%s224 + $0x30] sm:$0xff]
      %v253 = vld [vmem:[%s224 + $0x38] sm:$0xff]
      %v254 = vld [vmem:[%s224 + $0x40] sm:$0xff]
      %v255 = vld [vmem:[%s224 + $0x48] sm:$0xff]
      %v256 = vld [vmem:[%s224 + $0x50] sm:$0xff]
      %v257 = vld [vmem:[%s224 + $0x58] sm:$0xff]
      %v258 = vld [vmem:[%s224 + $0x60] sm:$0xff]
      %v259 = vld [vmem:[%s224 + $0x68] sm:$0xff]
      %v260 = vld [vmem:[%s224 + $0x70] sm:$0xff]
      %v261 = vld [vmem:[%s224 + $0x78] sm:$0xff]
      %v262 = vld [vmem:[%s224 + $0x80] sm:$0xff]
      %v263 = vld [vmem:[%s224 + $0x88] sm:$0xff]
      %v264 = vld [vmem:[%s224 + $0x90] sm:$0xff]
      %v265 = vld [vmem:[%s224 + $0x98] sm:$0xff]
      %v266 = vld [vmem:[%s224 + $0xa0] sm:$0xff]
      %v267 = vld [vmem:[%s224 + $0xa8] sm:$0xff]
      %v268 = vld [vmem:[%s224 + $0xb0] sm:$0xff]
      %v269 = vld [vmem:[%s224 + $0xb8] sm:$0xff]
      %v270 = vld [vmem:[%s224 + $0xc0] sm:$0xff]
      %v271 = vld [vmem:[%s224 + $0xc8] sm:$0xff]
      %v272 = vld [vmem:[%s224 + $0xd0] sm:$0xff]
      %v273 = vld [vmem:[%s224 + $0xd8] sm:$0xff]
      %v274 = vld [vmem:[%s224 + $0xe0] sm:$0xff]
      %v275 = vld [vmem:[%s224 + $0xe8] sm:$0xff]
      %v276 = vld [vmem:[%s224 + $0xf0] sm:$0xff]
      %v277 = vld [vmem:[%s224 + $0xf8] sm:$0xff]
      %v278 = vld [vmem:[%s224 + $0x100] sm:$0xff]
      %v279 = vld [vmem:[%s224 + $0x108] sm:$0xff]
      %v280 = vld [vmem:[%s224 + $0x110] sm:$0xff]
      %v281 = vld [vmem:[%s224 + $0x118] sm:$0xff]
      %v282 = vld [vmem:[%s224 + $0x120] sm:$0xff]
      %v283 = vld [vmem:[%s224 + $0x128] sm:$0xff]
      %v284 = vld [vmem:[%s224 + $0x130] sm:$0xff]
      %v285 = vld [vmem:[%s224 + $0x138] sm:$0xff]
      %v286 = vld [vmem:[%s224 + $0x140] sm:$0xff]
      %v287 = vld [vmem:[%s224 + $0x148] sm:$0xff]
      %v288 = vld [vmem:[%s224 + $0x150] sm:$0xff]
      %v289 = vld [vmem:[%s224 + $0x158] sm:$0xff]
      %v290 = vld [vmem:[%s224 + $0x160] sm:$0xff]
      %v291 = vld [vmem:[%s224 + $0x168] sm:$0xff]
      %v292 = vld [vmem:[%s224 + $0x170] sm:$0xff]
      %v293 = vld [vmem:[%s224 + $0x178] sm:$0xff]
      %v294 = vld [vmem:[%s224 + $0x180] sm:$0xff]
      %v295 = vld [vmem:[%s224 + $0x188] sm:$0xff]
      %v296 = vld [vmem:[%s224 + $0x190] sm:$0xff]
      %v297 = vld [vmem:[%s224 + $0x198] sm:$0xff]
      %v298 = vld [vmem:[%s224 + $0x1a0] sm:$0xff]
      %v299 = vld [vmem:[%s224 + $0x1a8] sm:$0xff]
      %v300 = vld [vmem:[%s224 + $0x1b0] sm:$0xff]
      %v301 = vld [vmem:[%s224 + $0x1b8] sm:$0xff]
      %v302 = vld [vmem:[%s224 + $0x1c0] sm:$0xff]
      %v303 = vld [vmem:[%s224 + $0x1c8] sm:$0xff]
      %v304 = vld [vmem:[%s224 + $0x1d0] sm:$0xff]
      %v305 = vld [vmem:[%s224 + $0x1d8] sm:$0xff]
      %v306 = vld [vmem:[%s224 + $0x1e0] sm:$0xff]
      %v307 = vld [vmem:[%s224 + $0x1e8] sm:$0xff]
      %v308 = vld [vmem:[%s224 + $0x1f0] sm:$0xff]
      %v309 = vld [vmem:[%s224 + $0x1f8] sm:$0xff]
      %v310 = vld [vmem:[%s224 + $0x200] sm:$0xff]
      %v311 = vld [vmem:[%s224 + $0x208] sm:$0xff]
      %v312 = vld [vmem:[%s224 + $0x210] sm:$0xff]
      %v313 = vld [vmem:[%s224 + $0x218] sm:$0xff]
      %v314 = vld [vmem:[%s224 + $0x220] sm:$0xff]
      %v315 = vld [vmem:[%s224 + $0x228] sm:$0xff]
      %v316 = vld [vmem:[%s224 + $0x230] sm:$0xff]
      %v317 = vld [vmem:[%s224 + $0x238] sm:$0xff]
      %v318 = vld [vmem:[%s224 + $0x240] sm:$0xff]
      %v319 = vld [vmem:[%s224 + $0x248] sm:$0xff]
      %v320 = vld [vmem:[%s224 + $0x250] sm:$0xff]
      %v321 = vld [vmem:[%s224 + $0x258] sm:$0xff]
      %v322 = vld [vmem:[%s224 + $0x260] sm:$0xff]
      %v323 = vld [vmem:[%s224 + $0x268] sm:$0xff]
      %v324 = vld [vmem:[%s224 + $0x270] sm:$0xff]
      %v325 = vld [vmem:[%s224 + $0x278] sm:$0xff]
      %v326 = vld [vmem:[%s224 + $0x280] sm:$0xff]
      %v327 = vld [vmem:[%s224 + $0x288] sm:$0xff]
      %v328 = vld [vmem:[%s224 + $0x290] sm:$0xff]
      %v329 = vld [vmem:[%s224 + $0x298] sm:$0xff]
      %v330 = vld [vmem:[%s1] sm:$0xff]
      %v331 = vld [vmem:[%s1 + $0x8] sm:$0xff]
      %v332 = vld [vmem:[%s1 + $0x10] sm:$0xff]
      %v333 = vld [vmem:[%s1 + $0x18] sm:$0xff]
      %v334 = vld [vmem:[%s1 + $0x20] sm:$0xff]
      %v335 = vld [vmem:[%s1 + $0x28] sm:$0xff]
      %v336 = vld [vmem:[%s1 + $0x30] sm:$0xff]
      %v337 = vld [vmem:[%s1 + $0x38] sm:$0xff]
      %v338 = vld [vmem:[%s1 + $0x40] sm:$0xff]
      %v339 = vld [vmem:[%s1 + $0x48] sm:$0xff]
      %v340 = vld [vmem:[%s1 + $0x50] sm:$0xff]
      %v341 = vld [vmem:[%s1 + $0x58] sm:$0xff]
      %v342 = vld [vmem:[%s1 + $0x60] sm:$0xff]
      %v343 = vld [vmem:[%s1 + $0x68] sm:$0xff]
      %v344 = vld [vmem:[%s1 + $0x70] sm:$0xff]
      %v345 = vld [vmem:[%s1 + $0x78] sm:$0xff]
      %v346 = vld [vmem:[%s1 + $0x80] sm:$0xff]
      %v347 = vld [vmem:[%s1 + $0x88] sm:$0xff]
      %v348 = vld [vmem:[%s1 + $0x90] sm:$0xff]
      %v349 = vld [vmem:[%s1 + $0x98] sm:$0xff]
      %v350 = vld [vmem:[%s1 + $0xa0] sm:$0xff]
      %v351 = vld [vmem:[%s1 + $0xa8] sm:$0xff]
      %v352 = vld [vmem:[%s1 + $0xb0] sm:$0xff]
      %v353 = vld [vmem:[%s1 + $0xb8] sm:$0xff]
      %v354 = vld [vmem:[%s1 + $0xc0] sm:$0xff]
      %v355 = vld [vmem:[%s1 + $0xc8] sm:$0xff]
      %v356 = vld [vmem:[%s1 + $0xd0] sm:$0xff]
      %v357 = vld [vmem:[%s1 + $0xd8] sm:$0xff]
      %v358 = vld [vmem:[%s1 + $0xe0] sm:$0xff]
      %v359 = vld [vmem:[%s1 + $0xe8] sm:$0xff]
      %v360 = vld [vmem:[%s1 + $0xf0] sm:$0xff]
      %v361 = vld [vmem:[%s1 + $0xf8] sm:$0xff]
      %v362 = vld [vmem:[%s1 + $0x100] sm:$0xff]
      %v363 = vld [vmem:[%s1 + $0x108] sm:$0xff]
      %v364 = vld [vmem:[%s1 + $0x110] sm:$0xff]
      %v365 = vld [vmem:[%s1 + $0x118] sm:$0xff]
      %v366 = vld [vmem:[%s1 + $0x120] sm:$0xff]
      %v367 = vld [vmem:[%s1 + $0x128] sm:$0xff]
      %v368 = vld [vmem:[%s1 + $0x130] sm:$0xff]
      %v369 = vld [vmem:[%s1 + $0x138] sm:$0xff]
      %v370 = vld [vmem:[%s1 + $0x140] sm:$0xff]
      %v371 = vld [vmem:[%s1 + $0x148] sm:$0xff]
      %v372 = vld [vmem:[%s1 + $0x150] sm:$0xff]
      %v373 = vld [vmem:[%s1 + $0x158] sm:$0xff]
      %v374 = vld [vmem:[%s1 + $0x160] sm:$0xff]
      %v375 = vld [vmem:[%s1 + $0x168] sm:$0xff]
      %v376 = vld [vmem:[%s1 + $0x170] sm:$0xff]
      %v377 = vld [vmem:[%s1 + $0x178] sm:$0xff]
      %v378 = vld [vmem:[%s1 + $0x180] sm:$0xff]
      %v379 = vld [vmem:[%s1 + $0x188] sm:$0xff]
      %v380 = vld [vmem:[%s1 + $0x190] sm:$0xff]
      %v381 = vld [vmem:[%s1 + $0x198] sm:$0xff]
      %v382 = vld [vmem:[%s1 + $0x1a0] sm:$0xff]
      %v383 = vld [vmem:[%s1 + $0x1a8] sm:$0xff]
      %v384 = vld [vmem:[%s1 + $0x1b0] sm:$0xff]
      %v385 = vld [vmem:[%s1 + $0x1b8] sm:$0xff]
      %v386 = vld [vmem:[%s1 + $0x1c0] sm:$0xff]
      %v387 = vld [vmem:[%s1 + $0x1c8] sm:$0xff]
      %v388 = vld [vmem:[%s1 + $0x1d0] sm:$0xff]
      %v389 = vld [vmem:[%s1 + $0x1d8] sm:$0xff]
      %v390 = vld [vmem:[%s1 + $0x1e0] sm:$0xff]
      %v391 = vld [vmem:[%s1 + $0x1e8] sm:$0xff]
      %v392 = vld [vmem:[%s1 + $0x1f0] sm:$0xff]
      %v393 = vld [vmem:[%s1 + $0x1f8] sm:$0xff]
      %v394 = vld [vmem:[%s1 + $0x200] sm:$0xff]
      %v395 = vld [vmem:[%s1 + $0x208] sm:$0xff]
      %v396 = vld [vmem:[%s1 + $0x210] sm:$0xff]
      %v397 = vld [vmem:[%s1 + $0x218] sm:$0xff]
      %v398 = vld [vmem:[%s1 + $0x220] sm:$0xff]
      %v399 = vld [vmem:[%s1 + $0x228] sm:$0xff]
      %v400 = vld [vmem:[%s1 + $0x230] sm:$0xff]
      %v401 = vld [vmem:[%s1 + $0x238] sm:$0xff]
      %v402 = vld [vmem:[%s1 + $0x240] sm:$0xff]
      %v403 = vld [vmem:[%s1 + $0x248] sm:$0xff]
      %v404 = vld [vmem:[%s1 + $0x250] sm:$0xff]
      %v405 = vld [vmem:[%s1 + $0x258] sm:$0xff]
      %v406 = vld [vmem:[%s1 + $0x260] sm:$0xff]
      %v407 = vld [vmem:[%s1 + $0x268] sm:$0xff]
      %v408 = vld [vmem:[%s1 + $0x270] sm:$0xff]
      %v409 = vld [vmem:[%s1 + $0x278] sm:$0xff]
      %v410 = vld [vmem:[%s1 + $0x280] sm:$0xff]
      %v411 = vld [vmem:[%s1 + $0x288] sm:$0xff]
      %v412 = vld [vmem:[%s1 + $0x290] sm:$0xff]
      %v413 = vld [vmem:[%s1 + $0x298] sm:$0xff]
      %415 = vset.pattern.permute.xlu0 0
      %416 = vperm.xlu0 %415, %v330
      %v417 = vpop.permute.xlu0 %416
      %420 = vset.pattern.permute.xlu0 0
      %421 = vperm.xlu0 %420, %v331
      %v422 = vpop.permute.xlu0 %421
      %425 = vset.pattern.permute.xlu0 0
      %426 = vperm.xlu0 %425, %v332
      %v427 = vpop.permute.xlu0 %426
      %430 = vset.pattern.permute.xlu0 0
      %431 = vperm.xlu0 %430, %v333
      %v432 = vpop.permute.xlu0 %431
      %435 = vset.pattern.permute.xlu0 0
      %436 = vperm.xlu0 %435, %v334
      %v437 = vpop.permute.xlu0 %436
      %440 = vset.pattern.permute.xlu0 0
      %441 = vperm.xlu0 %440, %v335
      %v442 = vpop.permute.xlu0 %441
      %445 = vset.pattern.permute.xlu0 0
      %446 = vperm.xlu0 %445, %v336
      %v447 = vpop.permute.xlu0 %446
      %450 = vset.pattern.permute.xlu0 0
      %451 = vperm.xlu0 %450, %v337
      %v452 = vpop.permute.xlu0 %451
      %455 = vset.pattern.permute.xlu0 0
      %456 = vperm.xlu0 %455, %v338
      %v457 = vpop.permute.xlu0 %456
      %460 = vset.pattern.permute.xlu0 0
      %461 = vperm.xlu0 %460, %v339
      %v462 = vpop.permute.xlu0 %461
      %465 = vset.pattern.permute.xlu0 0
      %466 = vperm.xlu0 %465, %v340
      %v467 = vpop.permute.xlu0 %466
      %470 = vset.pattern.permute.xlu0 0
      %471 = vperm.xlu0 %470, %v341
      %v472 = vpop.permute.xlu0 %471
      %475 = vset.pattern.permute.xlu0 0
      %476 = vperm.xlu0 %475, %v342
      %v477 = vpop.permute.xlu0 %476
      %480 = vset.pattern.permute.xlu0 0
      %481 = vperm.xlu0 %480, %v343
      %v482 = vpop.permute.xlu0 %481
      %485 = vset.pattern.permute.xlu0 0
      %486 = vperm.xlu0 %485, %v344
      %v487 = vpop.permute.xlu0 %486
      %490 = vset.pattern.permute.xlu0 0
      %491 = vperm.xlu0 %490, %v345
      %v492 = vpop.permute.xlu0 %491
      %495 = vset.pattern.permute.xlu0 0
      %496 = vperm.xlu0 %495, %v346
      %v497 = vpop.permute.xlu0 %496
      %500 = vset.pattern.permute.xlu0 0
      %501 = vperm.xlu0 %500, %v347
      %v502 = vpop.permute.xlu0 %501
      %505 = vset.pattern.permute.xlu0 0
      %506 = vperm.xlu0 %505, %v348
      %v507 = vpop.permute.xlu0 %506
      %510 = vset.pattern.permute.xlu0 0
      %511 = vperm.xlu0 %510, %v349
      %v512 = vpop.permute.xlu0 %511
      %515 = vset.pattern.permute.xlu0 0
      %516 = vperm.xlu0 %515, %v350
      %v517 = vpop.permute.xlu0 %516
      %520 = vset.pattern.permute.xlu0 0
      %521 = vperm.xlu0 %520, %v351
      %v522 = vpop.permute.xlu0 %521
      %525 = vset.pattern.permute.xlu0 0
      %526 = vperm.xlu0 %525, %v352
      %v527 = vpop.permute.xlu0 %526
      %530 = vset.pattern.permute.xlu0 0
      %531 = vperm.xlu0 %530, %v353
      %v532 = vpop.permute.xlu0 %531
      %535 = vset.pattern.permute.xlu0 0
      %536 = vperm.xlu0 %535, %v354
      %v537 = vpop.permute.xlu0 %536
      %540 = vset.pattern.permute.xlu0 0
      %541 = vperm.xlu0 %540, %v355
      %v542 = vpop.permute.xlu0 %541
      %545 = vset.pattern.permute.xlu0 0
      %546 = vperm.xlu0 %545, %v356
      %v547 = vpop.permute.xlu0 %546
      %550 = vset.pattern.permute.xlu0 0
      %551 = vperm.xlu0 %550, %v357
      %v552 = vpop.permute.xlu0 %551
      %555 = vset.pattern.permute.xlu0 0
      %556 = vperm.xlu0 %555, %v358
      %v557 = vpop.permute.xlu0 %556
      %560 = vset.pattern.permute.xlu0 0
      %561 = vperm.xlu0 %560, %v359
      %v562 = vpop.permute.xlu0 %561
      %565 = vset.pattern.permute.xlu0 0
      %566 = vperm.xlu0 %565, %v360
      %v567 = vpop.permute.xlu0 %566
      %570 = vset.pattern.permute.xlu0 0
      %571 = vperm.xlu0 %570, %v361
      %v572 = vpop.permute.xlu0 %571
      %575 = vset.pattern.permute.xlu0 0
      %576 = vperm.xlu0 %575, %v362
      %v577 = vpop.permute.xlu0 %576
      %580 = vset.pattern.permute.xlu0 0
      %581 = vperm.xlu0 %580, %v363
      %v582 = vpop.permute.xlu0 %581
      %585 = vset.pattern.permute.xlu0 0
      %586 = vperm.xlu0 %585, %v364
      %v587 = vpop.permute.xlu0 %586
      %590 = vset.pattern.permute.xlu0 0
      %591 = vperm.xlu0 %590, %v365
      %v592 = vpop.permute.xlu0 %591
      %595 = vset.pattern.permute.xlu0 0
      %596 = vperm.xlu0 %595, %v366
      %v597 = vpop.permute.xlu0 %596
      %600 = vset.pattern.permute.xlu0 0
      %601 = vperm.xlu0 %600, %v367
      %v602 = vpop.permute.xlu0 %601
      %605 = vset.pattern.permute.xlu0 0
      %606 = vperm.xlu0 %605, %v368
      %v607 = vpop.permute.xlu0 %606
      %610 = vset.pattern.permute.xlu0 0
      %611 = vperm.xlu0 %610, %v369
      %v612 = vpop.permute.xlu0 %611
      %615 = vset.pattern.permute.xlu0 0
      %616 = vperm.xlu0 %615, %v370
      %v617 = vpop.permute.xlu0 %616
      %620 = vset.pattern.permute.xlu0 0
      %621 = vperm.xlu0 %620, %v371
      %v622 = vpop.permute.xlu0 %621
      %625 = vset.pattern.permute.xlu0 0
      %626 = vperm.xlu0 %625, %v372
      %v627 = vpop.permute.xlu0 %626
      %630 = vset.pattern.permute.xlu0 0
      %631 = vperm.xlu0 %630, %v373
      %v632 = vpop.permute.xlu0 %631
      %635 = vset.pattern.permute.xlu0 0
      %636 = vperm.xlu0 %635, %v374
      %v637 = vpop.permute.xlu0 %636
      %640 = vset.pattern.permute.xlu0 0
      %641 = vperm.xlu0 %640, %v375
      %v642 = vpop.permute.xlu0 %641
      %645 = vset.pattern.permute.xlu0 0
      %646 = vperm.xlu0 %645, %v376
      %v647 = vpop.permute.xlu0 %646
      %650 = vset.pattern.permute.xlu0 0
      %651 = vperm.xlu0 %650, %v377
      %v652 = vpop.permute.xlu0 %651
      %655 = vset.pattern.permute.xlu0 0
      %656 = vperm.xlu0 %655, %v378
      %v657 = vpop.permute.xlu0 %656
      %660 = vset.pattern.permute.xlu0 0
      %661 = vperm.xlu0 %660, %v379
      %v662 = vpop.permute.xlu0 %661
      %665 = vset.pattern.permute.xlu0 0
      %666 = vperm.xlu0 %665, %v380
      %v667 = vpop.permute.xlu0 %666
      %670 = vset.pattern.permute.xlu0 0
      %671 = vperm.xlu0 %670, %v381
      %v672 = vpop.permute.xlu0 %671
      %675 = vset.pattern.permute.xlu0 0
      %676 = vperm.xlu0 %675, %v382
      %v677 = vpop.permute.xlu0 %676
      %680 = vset.pattern.permute.xlu0 0
      %681 = vperm.xlu0 %680, %v383
      %v682 = vpop.permute.xlu0 %681
      %685 = vset.pattern.permute.xlu0 0
      %686 = vperm.xlu0 %685, %v384
      %v687 = vpop.permute.xlu0 %686
      %690 = vset.pattern.permute.xlu0 0
      %691 = vperm.xlu0 %690, %v385
      %v692 = vpop.permute.xlu0 %691
      %695 = vset.pattern.permute.xlu0 0
      %696 = vperm.xlu0 %695, %v386
      %v697 = vpop.permute.xlu0 %696
      %700 = vset.pattern.permute.xlu0 0
      %701 = vperm.xlu0 %700, %v387
      %v702 = vpop.permute.xlu0 %701
      %705 = vset.pattern.permute.xlu0 0
      %706 = vperm.xlu0 %705, %v388
      %v707 = vpop.permute.xlu0 %706
      %710 = vset.pattern.permute.xlu0 0
      %711 = vperm.xlu0 %710, %v389
      %v712 = vpop.permute.xlu0 %711
      %715 = vset.pattern.permute.xlu0 0
      %716 = vperm.xlu0 %715, %v390
      %v717 = vpop.permute.xlu0 %716
      %720 = vset.pattern.permute.xlu0 0
      %721 = vperm.xlu0 %720, %v391
      %v722 = vpop.permute.xlu0 %721
      %725 = vset.pattern.permute.xlu0 0
      %726 = vperm.xlu0 %725, %v392
      %v727 = vpop.permute.xlu0 %726
      %730 = vset.pattern.permute.xlu0 0
      %731 = vperm.xlu0 %730, %v393
      %v732 = vpop.permute.xlu0 %731
      %735 = vset.pattern.permute.xlu0 0
      %736 = vperm.xlu0 %735, %v394
      %v737 = vpop.permute.xlu0 %736
      %740 = vset.pattern.permute.xlu0 0
      %741 = vperm.xlu0 %740, %v395
      %v742 = vpop.permute.xlu0 %741
      %745 = vset.pattern.permute.xlu0 0
      %746 = vperm.xlu0 %745, %v396
      %v747 = vpop.permute.xlu0 %746
      %750 = vset.pattern.permute.xlu0 0
      %751 = vperm.xlu0 %750, %v397
      %v752 = vpop.permute.xlu0 %751
      %755 = vset.pattern.permute.xlu0 0
      %756 = vperm.xlu0 %755, %v398
      %v757 = vpop.permute.xlu0 %756
      %760 = vset.pattern.permute.xlu0 0
      %761 = vperm.xlu0 %760, %v399
      %v762 = vpop.permute.xlu0 %761
      %765 = vset.pattern.permute.xlu0 0
      %766 = vperm.xlu0 %765, %v400
      %v767 = vpop.permute.xlu0 %766
      %770 = vset.pattern.permute.xlu0 0
      %771 = vperm.xlu0 %770, %v401
      %v772 = vpop.permute.xlu0 %771
      %775 = vset.pattern.permute.xlu0 0
      %776 = vperm.xlu0 %775, %v402
      %v777 = vpop.permute.xlu0 %776
      %780 = vset.pattern.permute.xlu0 0
      %781 = vperm.xlu0 %780, %v403
      %v782 = vpop.permute.xlu0 %781
      %785 = vset.pattern.permute.xlu0 0
      %786 = vperm.xlu0 %785, %v404
      %v787 = vpop.permute.xlu0 %786
      %790 = vset.pattern.permute.xlu0 0
      %791 = vperm.xlu0 %790, %v405
      %v792 = vpop.permute.xlu0 %791
      %795 = vset.pattern.permute.xlu0 0
      %796 = vperm.xlu0 %795, %v406
      %v797 = vpop.permute.xlu0 %796
      %800 = vset.pattern.permute.xlu0 0
      %801 = vperm.xlu0 %800, %v407
      %v802 = vpop.permute.xlu0 %801
      %805 = vset.pattern.permute.xlu0 0
      %806 = vperm.xlu0 %805, %v408
      %v807 = vpop.permute.xlu0 %806
      %810 = vset.pattern.permute.xlu0 0
      %811 = vperm.xlu0 %810, %v409
      %v812 = vpop.permute.xlu0 %811
      %815 = vset.pattern.permute.xlu0 0
      %816 = vperm.xlu0 %815, %v410
      %v817 = vpop.permute.xlu0 %816
      %820 = vset.pattern.permute.xlu0 0
      %821 = vperm.xlu0 %820, %v411
      %v822 = vpop.permute.xlu0 %821
      %825 = vset.pattern.permute.xlu0 0
      %826 = vperm.xlu0 %825, %v412
      %v827 = vpop.permute.xlu0 %826
      %830 = vset.pattern.permute.xlu0 0
      %831 = vperm.xlu0 %830, %v413
      %v832 = vpop.permute.xlu0 %831
      %v834 = vmul.f32 %v246, %v417
      %v835 = vmul.f32 %v247, %v422
      %v836 = vmul.f32 %v248, %v427
      %v837 = vmul.f32 %v249, %v432
      %v838 = vmul.f32 %v250, %v437
      %v839 = vmul.f32 %v251, %v442
      %v840 = vmul.f32 %v252, %v447
      %v841 = vmul.f32 %v253, %v452
      %v842 = vmul.f32 %v254, %v457
      %v843 = vmul.f32 %v255, %v462
      %v844 = vmul.f32 %v256, %v467
      %v845 = vmul.f32 %v257, %v472
      %v846 = vmul.f32 %v258, %v477
      %v847 = vmul.f32 %v259, %v482
      %v848 = vmul.f32 %v260, %v487
      %v849 = vmul.f32 %v261, %v492
      %v850 = vmul.f32 %v262, %v497
      %v851 = vmul.f32 %v263, %v502
      %v852 = vmul.f32 %v264, %v507
      %v853 = vmul.f32 %v265, %v512
      %v854 = vmul.f32 %v266, %v517
      %v855 = vmul.f32 %v267, %v522
      %v856 = vmul.f32 %v268, %v527
      %v857 = vmul.f32 %v269, %v532
      %v858 = vmul.f32 %v270, %v537
      %v859 = vmul.f32 %v271, %v542
      %v860 = vmul.f32 %v272, %v547
      %v861 = vmul.f32 %v273, %v552
      %v862 = vmul.f32 %v274, %v557
      %v863 = vmul.f32 %v275, %v562
      %v864 = vmul.f32 %v276, %v567
      %v865 = vmul.f32 %v277, %v572
      %v866 = vmul.f32 %v278, %v577
      %v867 = vmul.f32 %v279, %v582
      %v868 = vmul.f32 %v280, %v587
      %v869 = vmul.f32 %v281, %v592
      %v870 = vmul.f32 %v282, %v597
      %v871 = vmul.f32 %v283, %v602
      %v872 = vmul.f32 %v284, %v607
      %v873 = vmul.f32 %v285, %v612
      %v874 = vmul.f32 %v286, %v617
      %v875 = vmul.f32 %v287, %v622
      %v876 = vmul.f32 %v288, %v627
      %v877 = vmul.f32 %v289, %v632
      %v878 = vmul.f32 %v290, %v637
      %v879 = vmul.f32 %v291, %v642
      %v880 = vmul.f32 %v292, %v647
      %v881 = vmul.f32 %v293, %v652
      %v882 = vmul.f32 %v294, %v657
      %v883 = vmul.f32 %v295, %v662
      %v884 = vmul.f32 %v296, %v667
      %v885 = vmul.f32 %v297, %v672
      %v886 = vmul.f32 %v298, %v677
      %v887 = vmul.f32 %v299, %v682
      %v888 = vmul.f32 %v300, %v687
      %v889 = vmul.f32 %v301, %v692
      %v890 = vmul.f32 %v302, %v697
      %v891 = vmul.f32 %v303, %v702
      %v892 = vmul.f32 %v304, %v707
      %v893 = vmul.f32 %v305, %v712
      %v894 = vmul.f32 %v306, %v717
      %v895 = vmul.f32 %v307, %v722
      %v896 = vmul.f32 %v308, %v727
      %v897 = vmul.f32 %v309, %v732
      %v898 = vmul.f32 %v310, %v737
      %v899 = vmul.f32 %v311, %v742
      %v900 = vmul.f32 %v312, %v747
      %v901 = vmul.f32 %v313, %v752
      %v902 = vmul.f32 %v314, %v757
      %v903 = vmul.f32 %v315, %v762
      %v904 = vmul.f32 %v316, %v767
      %v905 = vmul.f32 %v317, %v772
      %v906 = vmul.f32 %v318, %v777
      %v907 = vmul.f32 %v319, %v782
      %v908 = vmul.f32 %v320, %v787
      %v909 = vmul.f32 %v321, %v792
      %v910 = vmul.f32 %v322, %v797
      %v911 = vmul.f32 %v323, %v802
      %v912 = vmul.f32 %v324, %v807
      %v913 = vmul.f32 %v325, %v812
      %v914 = vmul.f32 %v326, %v817
      %v915 = vmul.f32 %v327, %v822
      %v916 = vmul.f32 %v328, %v827
      %v917 = vmul.f32 %v329, %v832
      %v918 = vpack.c.bf16 %v835, %v834
      %v919 = vpack.c.bf16 %v837, %v836
      %v920 = vpack.c.bf16 %v839, %v838
      %v921 = vpack.c.bf16 %v841, %v840
      %v922 = vpack.c.bf16 %v843, %v842
      %v923 = vpack.c.bf16 %v845, %v844
      %v924 = vpack.c.bf16 %v847, %v846
      %v925 = vpack.c.bf16 %v849, %v848
      %v926 = vpack.c.bf16 %v851, %v850
      %v927 = vpack.c.bf16 %v853, %v852
      %v928 = vpack.c.bf16 %v855, %v854
      %v929 = vpack.c.bf16 %v857, %v856
      %v930 = vpack.c.bf16 %v859, %v858
      %v931 = vpack.c.bf16 %v861, %v860
      %v932 = vpack.c.bf16 %v863, %v862
      %v933 = vpack.c.bf16 %v865, %v864
      %v934 = vpack.c.bf16 %v867, %v866
      %v935 = vpack.c.bf16 %v869, %v868
      %v936 = vpack.c.bf16 %v871, %v870
      %v937 = vpack.c.bf16 %v873, %v872
      %v938 = vpack.c.bf16 %v875, %v874
      %v939 = vpack.c.bf16 %v877, %v876
      %v940 = vpack.c.bf16 %v879, %v878
      %v941 = vpack.c.bf16 %v881, %v880
      %v942 = vpack.c.bf16 %v883, %v882
      %v943 = vpack.c.bf16 %v885, %v884
      %v944 = vpack.c.bf16 %v887, %v886
      %v945 = vpack.c.bf16 %v889, %v888
      %v946 = vpack.c.bf16 %v891, %v890
      %v947 = vpack.c.bf16 %v893, %v892
      %v948 = vpack.c.bf16 %v895, %v894
      %v949 = vpack.c.bf16 %v897, %v896
      %v950 = vpack.c.bf16 %v899, %v898
      %v951 = vpack.c.bf16 %v901, %v900
      %v952 = vpack.c.bf16 %v903, %v902
      %v953 = vpack.c.bf16 %v905, %v904
      %v954 = vpack.c.bf16 %v907, %v906
      %v955 = vpack.c.bf16 %v909, %v908
      %v956 = vpack.c.bf16 %v911, %v910
      %v957 = vpack.c.bf16 %v913, %v912
      %v958 = vpack.c.bf16 %v915, %v914
      %v959 = vpack.c.bf16 %v917, %v916
      %v960 = vld [vmem:[%s230] sm:$0xff]
      %v961 = vld [vmem:[%s230 + $0x8] sm:$0xff]
      %v962 = vld [vmem:[%s230 + $0x10] sm:$0xff]
      %v963 = vld [vmem:[%s230 + $0x18] sm:$0xff]
      %v964 = vld [vmem:[%s230 + $0x20] sm:$0xff]
      %v965 = vld [vmem:[%s230 + $0x28] sm:$0xff]
      %v966 = vld [vmem:[%s230 + $0x30] sm:$0xff]
      %v967 = vld [vmem:[%s230 + $0x38] sm:$0xff]
      %v968 = vld [vmem:[%s230 + $0x40] sm:$0xff]
      %v969 = vld [vmem:[%s230 + $0x48] sm:$0xff]
      %v970 = vld [vmem:[%s230 + $0x50] sm:$0xff]
      %v971 = vld [vmem:[%s230 + $0x58] sm:$0xff]
      %v972 = vld [vmem:[%s230 + $0x60] sm:$0xff]
      %v973 = vld [vmem:[%s230 + $0x68] sm:$0xff]
      %v974 = vld [vmem:[%s230 + $0x70] sm:$0xff]
      %v975 = vld [vmem:[%s230 + $0x78] sm:$0xff]
      %v976 = vld [vmem:[%s230 + $0x80] sm:$0xff]
      %v977 = vld [vmem:[%s230 + $0x88] sm:$0xff]
      %v978 = vld [vmem:[%s230 + $0x90] sm:$0xff]
      %v979 = vld [vmem:[%s230 + $0x98] sm:$0xff]
      %v980 = vld [vmem:[%s230 + $0xa0] sm:$0xff]
      %v981 = vld [vmem:[%s230 + $0xa8] sm:$0xff]
      %v982 = vld [vmem:[%s230 + $0xb0] sm:$0xff]
      %v983 = vld [vmem:[%s230 + $0xb8] sm:$0xff]
      %v984 = vld [vmem:[%s230 + $0xc0] sm:$0xff]
      %v985 = vld [vmem:[%s230 + $0xc8] sm:$0xff]
      %v986 = vld [vmem:[%s230 + $0xd0] sm:$0xff]
      %v987 = vld [vmem:[%s230 + $0xd8] sm:$0xff]
      %v988 = vld [vmem:[%s230 + $0xe0] sm:$0xff]
      %v989 = vld [vmem:[%s230 + $0xe8] sm:$0xff]
      %v990 = vld [vmem:[%s230 + $0xf0] sm:$0xff]
      %v991 = vld [vmem:[%s230 + $0xf8] sm:$0xff]
      %v992 = vld [vmem:[%s230 + $0x100] sm:$0xff]
      %v993 = vld [vmem:[%s230 + $0x108] sm:$0xff]
      %v994 = vld [vmem:[%s230 + $0x110] sm:$0xff]
      %v995 = vld [vmem:[%s230 + $0x118] sm:$0xff]
      %v1032 = vunpack.c.l.b16 %v960
      %v1033 = vunpack.c.h.b16 %v960
      %v1034 = vunpack.c.l.b16 %v961
      %v1035 = vunpack.c.h.b16 %v961
      %v1036 = vunpack.c.l.b16 %v962
      %v1037 = vunpack.c.h.b16 %v962
      %v1038 = vunpack.c.l.b16 %v963
      %v1039 = vunpack.c.h.b16 %v963
      %v1040 = vunpack.c.l.b16 %v964
      %v1041 = vunpack.c.h.b16 %v964
      %v1042 = vunpack.c.l.b16 %v965
      %v1043 = vunpack.c.h.b16 %v965
      %v1044 = vunpack.c.l.b16 %v966
      %v1045 = vunpack.c.h.b16 %v966
      %v1046 = vunpack.c.l.b16 %v967
      %v1047 = vunpack.c.h.b16 %v967
      %v1048 = vunpack.c.l.b16 %v968
      %v1049 = vunpack.c.h.b16 %v968
      %v1050 = vunpack.c.l.b16 %v969
      %v1051 = vunpack.c.h.b16 %v969
      %v1052 = vunpack.c.l.b16 %v970
      %v1053 = vunpack.c.h.b16 %v970
      %v1054 = vunpack.c.l.b16 %v971
      %v1055 = vunpack.c.h.b16 %v971
      %v1056 = vunpack.c.l.b16 %v972
      %v1057 = vunpack.c.h.b16 %v972
      %v1058 = vunpack.c.l.b16 %v973
      %v1059 = vunpack.c.h.b16 %v973
      %v1060 = vunpack.c.l.b16 %v974
      %v1061 = vunpack.c.h.b16 %v974
      %v1062 = vunpack.c.l.b16 %v975
      %v1063 = vunpack.c.h.b16 %v975
      %v1064 = vunpack.c.l.b16 %v976
      %v1065 = vunpack.c.h.b16 %v976
      %v1066 = vunpack.c.l.b16 %v977
      %v1067 = vunpack.c.h.b16 %v977
      %v1068 = vunpack.c.l.b16 %v978
      %v1069 = vunpack.c.h.b16 %v978
      %v1070 = vunpack.c.l.b16 %v979
      %v1071 = vunpack.c.h.b16 %v979
      %v1072 = vunpack.c.l.b16 %v980
      %v1073 = vunpack.c.h.b16 %v980
      %v1074 = vunpack.c.l.b16 %v981
      %v1075 = vunpack.c.h.b16 %v981
      %v1076 = vunpack.c.l.b16 %v982
      %v1077 = vunpack.c.h.b16 %v982
      %v1078 = vunpack.c.l.b16 %v983
      %v1079 = vunpack.c.h.b16 %v983
      %v1080 = vunpack.c.l.b16 %v984
      %v1081 = vunpack.c.h.b16 %v984
      %v1082 = vunpack.c.l.b16 %v985
      %v1083 = vunpack.c.h.b16 %v985
      %v1084 = vunpack.c.l.b16 %v986
      %v1085 = vunpack.c.h.b16 %v986
      %v1086 = vunpack.c.l.b16 %v987
      %v1087 = vunpack.c.h.b16 %v987
      %v1088 = vunpack.c.l.b16 %v988
      %v1089 = vunpack.c.h.b16 %v988
      %v1090 = vunpack.c.l.b16 %v989
      %v1091 = vunpack.c.h.b16 %v989
      %v1092 = vunpack.c.l.b16 %v990
      %v1093 = vunpack.c.h.b16 %v990
      %v1094 = vunpack.c.l.b16 %v991
      %v1095 = vunpack.c.h.b16 %v991
      %v1096 = vunpack.c.l.b16 %v992
      %v1097 = vunpack.c.h.b16 %v992
      %v1098 = vunpack.c.l.b16 %v993
      %v1099 = vunpack.c.h.b16 %v993
      %v1100 = vunpack.c.l.b16 %v994
      %v1101 = vunpack.c.h.b16 %v994
      %v1102 = vunpack.c.l.b16 %v995
      %v1103 = vunpack.c.h.b16 %v995
      %v1104 = vpack.c.b16 %v1038, %v1032
      %v1105 = vpack.c.b16 %v1039, %v1033
      %v1106 = vpack.c.b16 %v1040, %v1034
      %v1107 = vpack.c.b16 %v1041, %v1035
      %v1108 = vpack.c.b16 %v1042, %v1036
      %v1109 = vpack.c.b16 %v1043, %v1037
      %v1110 = vpack.c.b16 %v1050, %v1044
      %v1111 = vpack.c.b16 %v1051, %v1045
      %v1112 = vpack.c.b16 %v1052, %v1046
      %v1113 = vpack.c.b16 %v1053, %v1047
      %v1114 = vpack.c.b16 %v1054, %v1048
      %v1115 = vpack.c.b16 %v1055, %v1049
      %v1116 = vpack.c.b16 %v1062, %v1056
      %v1117 = vpack.c.b16 %v1063, %v1057
      %v1118 = vpack.c.b16 %v1064, %v1058
      %v1119 = vpack.c.b16 %v1065, %v1059
      %v1120 = vpack.c.b16 %v1066, %v1060
      %v1121 = vpack.c.b16 %v1067, %v1061
      %v1122 = vpack.c.b16 %v1074, %v1068
      %v1123 = vpack.c.b16 %v1075, %v1069
      %v1124 = vpack.c.b16 %v1076, %v1070
      %v1125 = vpack.c.b16 %v1077, %v1071
      %v1126 = vpack.c.b16 %v1078, %v1072
      %v1127 = vpack.c.b16 %v1079, %v1073
      %v1128 = vpack.c.b16 %v1086, %v1080
      %v1129 = vpack.c.b16 %v1087, %v1081
      %v1130 = vpack.c.b16 %v1088, %v1082
      %v1131 = vpack.c.b16 %v1089, %v1083
      %v1132 = vpack.c.b16 %v1090, %v1084
      %v1133 = vpack.c.b16 %v1091, %v1085
      %v1134 = vpack.c.b16 %v1098, %v1092
      %v1135 = vpack.c.b16 %v1099, %v1093
      %v1136 = vpack.c.b16 %v1100, %v1094
      %v1137 = vpack.c.b16 %v1101, %v1095
      %v1138 = vpack.c.b16 %v1102, %v1096
      %v1139 = vpack.c.b16 %v1103, %v1097
      %vm1170 = vcmask 261120
      %v1172 = vsel %vm1170, %v1109, 0
      %v1175 = vsel %vm1170, %v1115, 0
      %v1178 = vsel %vm1170, %v1121, 0
      %v1181 = vsel %vm1170, %v1127, 0
      %v1184 = vsel %vm1170, %v1133, 0
      %v1187 = vsel %vm1170, %v1139, 0
      %1189 = vmatpush.bf16.msra.mxu0 %v925
      %1190 = vmatpush.bf16.msra.mxu0 %v924
      %1191 = vmatpush.bf16.msra.mxu0 %v923
      %1192 = vmatpush.bf16.msra.mxu0 %v922
      %1193 = vmatpush.bf16.msra.mxu0 %v921
      %1194 = vmatpush.bf16.msra.mxu0 %v920
      %1195 = vmatpush.bf16.msra.mxu0 %v919
      %1196 = vmatpush.bf16.msra.mxu0 %v918
      %1197 = vmatmul.bf16.gmra.mxu0 %v1104
      %v1198 = vpop.f32.mrf.mxu0
      %v1199 = vadd.f32 0.0, %v1198
      %v1200 = vpop.f32.mrf.mxu0
      %v1201 = vadd.f32 0.0, %v1200
      %1202 = vmatmul.bf16.gmra.mxu0 %v1110
      %v1203 = vpop.f32.mrf.mxu0
      %v1204 = vadd.f32 0.0, %v1203
      %v1205 = vpop.f32.mrf.mxu0
      %v1206 = vadd.f32 0.0, %v1205
      %1207 = vmatmul.bf16.gmra.mxu0 %v1116
      %v1208 = vpop.f32.mrf.mxu0
      %v1209 = vadd.f32 0.0, %v1208
      %v1210 = vpop.f32.mrf.mxu0
      %v1211 = vadd.f32 0.0, %v1210
      %1212 = vmatmul.bf16.gmra.mxu0 %v1122
      %v1213 = vpop.f32.mrf.mxu0
      %v1214 = vadd.f32 0.0, %v1213
      %v1215 = vpop.f32.mrf.mxu0
      %v1216 = vadd.f32 0.0, %v1215
      %1217 = vmatmul.bf16.gmra.mxu0 %v1128
      %v1218 = vpop.f32.mrf.mxu0
      %v1219 = vadd.f32 0.0, %v1218
      %v1220 = vpop.f32.mrf.mxu0
      %v1221 = vadd.f32 0.0, %v1220
      %1222 = vmatmul.bf16.gmra.mxu0 %v1134
      %v1223 = vpop.f32.mrf.mxu0
      %v1224 = vadd.f32 0.0, %v1223
      %v1225 = vpop.f32.mrf.mxu0
      %v1226 = vadd.f32 0.0, %v1225
      %1227 = vdwg.mxu0
      %1228 = vmatpush.bf16.msra.mxu0 %v933
      %1229 = vmatpush.bf16.msra.mxu0 %v932
      %1230 = vmatpush.bf16.msra.mxu0 %v931
      %1231 = vmatpush.bf16.msra.mxu0 %v930
      %1232 = vmatpush.bf16.msra.mxu0 %v929
      %1233 = vmatpush.bf16.msra.mxu0 %v928
      %1234 = vmatpush.bf16.msra.mxu0 %v927
      %1235 = vmatpush.bf16.msra.mxu0 %v926
      %1236 = vmatmul.bf16.gmra.mxu0 %v1105
      %v1237 = vpop.f32.mrf.mxu0
      %v1238 = vadd.f32 %v1199, %v1237
      %v1239 = vpop.f32.mrf.mxu0
      %v1240 = vadd.f32 %v1201, %v1239
      %1241 = vmatmul.bf16.gmra.mxu0 %v1111
      %v1242 = vpop.f32.mrf.mxu0
      %v1243 = vadd.f32 %v1204, %v1242
      %v1244 = vpop.f32.mrf.mxu0
      %v1245 = vadd.f32 %v1206, %v1244
      %1246 = vmatmul.bf16.gmra.mxu0 %v1117
      %v1247 = vpop.f32.mrf.mxu0
      %v1248 = vadd.f32 %v1209, %v1247
      %v1249 = vpop.f32.mrf.mxu0
      %v1250 = vadd.f32 %v1211, %v1249
      %1251 = vmatmul.bf16.gmra.mxu0 %v1123
      %v1252 = vpop.f32.mrf.mxu0
      %v1253 = vadd.f32 %v1214, %v1252
      %v1254 = vpop.f32.mrf.mxu0
      %v1255 = vadd.f32 %v1216, %v1254
      %1256 = vmatmul.bf16.gmra.mxu0 %v1129
      %v1257 = vpop.f32.mrf.mxu0
      %v1258 = vadd.f32 %v1219, %v1257
      %v1259 = vpop.f32.mrf.mxu0
      %v1260 = vadd.f32 %v1221, %v1259
      %1261 = vmatmul.bf16.gmra.mxu0 %v1135
      %v1262 = vpop.f32.mrf.mxu0
      %v1263 = vadd.f32 %v1224, %v1262
      %v1264 = vpop.f32.mrf.mxu0
      %v1265 = vadd.f32 %v1226, %v1264
      %1266 = vdwg.mxu0
      %1267 = vmatpush.bf16.msra.mxu0 %v941
      %1268 = vmatpush.bf16.msra.mxu0 %v940
      %1269 = vmatpush.bf16.msra.mxu0 %v939
      %1270 = vmatpush.bf16.msra.mxu0 %v938
      %1271 = vmatpush.bf16.msra.mxu0 %v937
      %1272 = vmatpush.bf16.msra.mxu0 %v936
      %1273 = vmatpush.bf16.msra.mxu0 %v935
      %1274 = vmatpush.bf16.msra.mxu0 %v934
      %1275 = vmatmul.bf16.gmra.mxu0 %v1106
      %v1276 = vpop.f32.mrf.mxu0
      %v1277 = vadd.f32 %v1238, %v1276
      %v1278 = vpop.f32.mrf.mxu0
      %v1279 = vadd.f32 %v1240, %v1278
      %1280 = vmatmul.bf16.gmra.mxu0 %v1112
      %v1281 = vpop.f32.mrf.mxu0
      %v1282 = vadd.f32 %v1243, %v1281
      %v1283 = vpop.f32.mrf.mxu0
      %v1284 = vadd.f32 %v1245, %v1283
      %1285 = vmatmul.bf16.gmra.mxu0 %v1118
      %v1286 = vpop.f32.mrf.mxu0
      %v1287 = vadd.f32 %v1248, %v1286
      %v1288 = vpop.f32.mrf.mxu0
      %v1289 = vadd.f32 %v1250, %v1288
      %1290 = vmatmul.bf16.gmra.mxu0 %v1124
      %v1291 = vpop.f32.mrf.mxu0
      %v1292 = vadd.f32 %v1253, %v1291
      %v1293 = vpop.f32.mrf.mxu0
      %v1294 = vadd.f32 %v1255, %v1293
      %1295 = vmatmul.bf16.gmra.mxu0 %v1130
      %v1296 = vpop.f32.mrf.mxu0
      %v1297 = vadd.f32 %v1258, %v1296
      %v1298 = vpop.f32.mrf.mxu0
      %v1299 = vadd.f32 %v1260, %v1298
      %1300 = vmatmul.bf16.gmra.mxu0 %v1136
      %v1301 = vpop.f32.mrf.mxu0
      %v1302 = vadd.f32 %v1263, %v1301
      %v1303 = vpop.f32.mrf.mxu0
      %v1304 = vadd.f32 %v1265, %v1303
      %1305 = vdwg.mxu0
      %1306 = vmatpush.bf16.msra.mxu0 %v949
      %1307 = vmatpush.bf16.msra.mxu0 %v948
      %1308 = vmatpush.bf16.msra.mxu0 %v947
      %1309 = vmatpush.bf16.msra.mxu0 %v946
      %1310 = vmatpush.bf16.msra.mxu0 %v945
      %1311 = vmatpush.bf16.msra.mxu0 %v944
      %1312 = vmatpush.bf16.msra.mxu0 %v943
      %1313 = vmatpush.bf16.msra.mxu0 %v942
      %1314 = vmatmul.bf16.gmra.mxu0 %v1107
      %v1315 = vpop.f32.mrf.mxu0
      %v1316 = vadd.f32 %v1277, %v1315
      %v1317 = vpop.f32.mrf.mxu0
      %v1318 = vadd.f32 %v1279, %v1317
      %1319 = vmatmul.bf16.gmra.mxu0 %v1113
      %v1320 = vpop.f32.mrf.mxu0
      %v1321 = vadd.f32 %v1282, %v1320
      %v1322 = vpop.f32.mrf.mxu0
      %v1323 = vadd.f32 %v1284, %v1322
      %1324 = vmatmul.bf16.gmra.mxu0 %v1119
      %v1325 = vpop.f32.mrf.mxu0
      %v1326 = vadd.f32 %v1287, %v1325
      %v1327 = vpop.f32.mrf.mxu0
      %v1328 = vadd.f32 %v1289, %v1327
      %1329 = vmatmul.bf16.gmra.mxu0 %v1125
      %v1330 = vpop.f32.mrf.mxu0
      %v1331 = vadd.f32 %v1292, %v1330
      %v1332 = vpop.f32.mrf.mxu0
      %v1333 = vadd.f32 %v1294, %v1332
      %1334 = vmatmul.bf16.gmra.mxu0 %v1131
      %v1335 = vpop.f32.mrf.mxu0
      %v1336 = vadd.f32 %v1297, %v1335
      %v1337 = vpop.f32.mrf.mxu0
      %v1338 = vadd.f32 %v1299, %v1337
      %1339 = vmatmul.bf16.gmra.mxu0 %v1137
      %v1340 = vpop.f32.mrf.mxu0
      %v1341 = vadd.f32 %v1302, %v1340
      %v1342 = vpop.f32.mrf.mxu0
      %v1343 = vadd.f32 %v1304, %v1342
      %1344 = vdwg.mxu0
      %1345 = vmatpush.bf16.msra.mxu0 %v957
      %1346 = vmatpush.bf16.msra.mxu0 %v956
      %1347 = vmatpush.bf16.msra.mxu0 %v955
      %1348 = vmatpush.bf16.msra.mxu0 %v954
      %1349 = vmatpush.bf16.msra.mxu0 %v953
      %1350 = vmatpush.bf16.msra.mxu0 %v952
      %1351 = vmatpush.bf16.msra.mxu0 %v951
      %1352 = vmatpush.bf16.msra.mxu0 %v950
      %1353 = vmatmul.bf16.gmra.mxu0 %v1108
      %v1354 = vpop.f32.mrf.mxu0
      %v1355 = vadd.f32 %v1316, %v1354
      %v1356 = vpop.f32.mrf.mxu0
      %v1357 = vadd.f32 %v1318, %v1356
      %1358 = vmatmul.bf16.gmra.mxu0 %v1114
      %v1359 = vpop.f32.mrf.mxu0
      %v1360 = vadd.f32 %v1321, %v1359
      %v1361 = vpop.f32.mrf.mxu0
      %v1362 = vadd.f32 %v1323, %v1361
      %1363 = vmatmul.bf16.gmra.mxu0 %v1120
      %v1364 = vpop.f32.mrf.mxu0
      %v1365 = vadd.f32 %v1326, %v1364
      %v1366 = vpop.f32.mrf.mxu0
      %v1367 = vadd.f32 %v1328, %v1366
      %1368 = vmatmul.bf16.gmra.mxu0 %v1126
      %v1369 = vpop.f32.mrf.mxu0
      %v1370 = vadd.f32 %v1331, %v1369
      %v1371 = vpop.f32.mrf.mxu0
      %v1372 = vadd.f32 %v1333, %v1371
      %1373 = vmatmul.bf16.gmra.mxu0 %v1132
      %v1374 = vpop.f32.mrf.mxu0
      %v1375 = vadd.f32 %v1336, %v1374
      %v1376 = vpop.f32.mrf.mxu0
      %v1377 = vadd.f32 %v1338, %v1376
      %1378 = vmatmul.bf16.gmra.mxu0 %v1138
      %v1379 = vpop.f32.mrf.mxu0
      %v1380 = vadd.f32 %v1341, %v1379
      %v1381 = vpop.f32.mrf.mxu0
      %v1382 = vadd.f32 %v1343, %v1381
      %1383 = vdwg.mxu0
      %1384 = vmatpush.bf16.msra.mxu0 0
      %1385 = vmatpush.bf16.msra.mxu0 0
      %1386 = vmatpush.bf16.msra.mxu0 0
      %1387 = vmatpush.bf16.msra.mxu0 0
      %1388 = vmatpush.bf16.msra.mxu0 0
      %1389 = vmatpush.bf16.msra.mxu0 0
      %1390 = vmatpush.bf16.msra.mxu0 %v959
      %1391 = vmatpush.bf16.msra.mxu0 %v958
      %1392 = vmatmul.bf16.gmra.mxu0 %v1172
      %v1393 = vpop.f32.mrf.mxu0
      %v1394 = vadd.f32 %v1355, %v1393
      %v1395 = vpop.f32.mrf.mxu0
      %v1396 = vadd.f32 %v1357, %v1395
      %1397 = vmatmul.bf16.gmra.mxu0 %v1175
      %v1398 = vpop.f32.mrf.mxu0
      %v1399 = vadd.f32 %v1360, %v1398
      %v1400 = vpop.f32.mrf.mxu0
      %v1401 = vadd.f32 %v1362, %v1400
      %1402 = vmatmul.bf16.gmra.mxu0 %v1178
      %v1403 = vpop.f32.mrf.mxu0
      %v1404 = vadd.f32 %v1365, %v1403
      %v1405 = vpop.f32.mrf.mxu0
      %v1406 = vadd.f32 %v1367, %v1405
      %1407 = vmatmul.bf16.gmra.mxu0 %v1181
      %v1408 = vpop.f32.mrf.mxu0
      %v1409 = vadd.f32 %v1370, %v1408
      %v1410 = vpop.f32.mrf.mxu0
      %v1411 = vadd.f32 %v1372, %v1410
      %1412 = vmatmul.bf16.gmra.mxu0 %v1184
      %v1413 = vpop.f32.mrf.mxu0
      %v1414 = vadd.f32 %v1375, %v1413
      %v1415 = vpop.f32.mrf.mxu0
      %v1416 = vadd.f32 %v1377, %v1415
      %1417 = vmatmul.bf16.gmra.mxu0 %v1187
      %v1418 = vpop.f32.mrf.mxu0
      %v1419 = vadd.f32 %v1380, %v1418
      %v1420 = vpop.f32.mrf.mxu0
      %v1421 = vadd.f32 %v1382, %v1420
      %1422 = vdwg.mxu0
      %vm1423 = vcmask 400384
      %1424 = vst.msk [vmem:[%s243] sm:$0xff] %vm1423, %v1394
      %1425 = vst.msk [vmem:[%s243 + $0x8] sm:$0xff] %vm1423, %v1396
      %1426 = vst.msk [vmem:[%s243 + $0x10] sm:$0xff] %vm1423, %v1399
      %1427 = vst.msk [vmem:[%s243 + $0x18] sm:$0xff] %vm1423, %v1401
      %1428 = vst.msk [vmem:[%s243 + $0x20] sm:$0xff] %vm1423, %v1404
      %1429 = vst.msk [vmem:[%s243 + $0x28] sm:$0xff] %vm1423, %v1406
      %1430 = vst.msk [vmem:[%s243 + $0x30] sm:$0xff] %vm1423, %v1409
      %1431 = vst.msk [vmem:[%s243 + $0x38] sm:$0xff] %vm1423, %v1411
      %1432 = vst.msk [vmem:[%s243 + $0x40] sm:$0xff] %vm1423, %v1414
      %1433 = vst.msk [vmem:[%s243 + $0x48] sm:$0xff] %vm1423, %v1416
      %1434 = vst.msk [vmem:[%s243 + $0x50] sm:$0xff] %vm1423, %v1419
      %1435 = vst.msk [vmem:[%s243 + $0x58] sm:$0xff] %vm1423, %v1421
      %s1436 = smul.u32 12, %s20
      %p1437 = scmp.lt.s32.totalorder %s19, 0
      %s1438 = scalar_select %p1437, %s19, 0
      %p1439 = scmp.lt.s32.totalorder %s1436, 23
      %s1440 = scalar_select %p1439, %s1436, 23
      %p1441 = scmp.lt.s32.totalorder %s21, 0
      %s1442 = scalar_select %p1441, %s21, 0
      %s1443 = sadd.s32 %s1442, %s1440
      %s1444 = smul.addr %s1438, 24
      %s1445 = sadd.s32 %s1443, %s1444
      %s1446 = smul.addr %s1445, 8
      %s1447 = scalar_lea.vmem %s3, %s1446
      // Predicated region
      $region33: #{tpu_custom_call.1} parent=31 // pred_check
        %p1448 = pneg %p130
      $region34: #{tpu_custom_call.1} parent=31 // pred_check_branch
        %1450 = sbr.rel (%p1448) target = $region36
      $region35: #{tpu_custom_call.1} parent=31 // pred_region
        %s1451 = smul.u32 12, %s20
      $region36: #{tpu_custom_call.1} parent=31 // pred_fallthru
        _
    $region32: #{tpu_custom_call.1} parent=5 // pred_fallthru
      _
    %p1452 = scmp.le.s32.totalorder 2, %s9
    // Predicated region
    $region37: #{tpu_custom_call.1} parent=5 // pred_check
      %p1453 = pneg %p1452
    $region38: #{tpu_custom_call.1} parent=5 // pred_check_branch
      %1455 = sbr.rel (%p1453) target = $region40
    $region39: #{tpu_custom_call.1} parent=5 // pred_region
      %s1456 = ssub.s32 %s9, 2
      // Predicated region
      $region41: #{tpu_custom_call.1} parent=39 // pred_check
        %p1457 = pneg %p136
      $region42: #{tpu_custom_call.1} parent=39 // pred_check_branch
        %1459 = sbr.rel (%p1457) target = $region44
      $region43: #{tpu_custom_call.1} parent=39 // pred_region
        %s1460 = smul.u32 12, %s23
        %p1461 = scmp.lt.s32.totalorder %s22, 0
        %s1462 = scalar_select %p1461, %s22, 0
        %p1463 = scmp.lt.s32.totalorder %s1460, 23
        %s1464 = scalar_select %p1463, %s1460, 23
        %p1465 = scmp.lt.s32.totalorder %s24, 0
        %s1466 = scalar_select %p1465, %s24, 0
        %s1467 = sadd.s32 %s1466, %s1464
        %s1468 = smul.addr %s1462, 24
        %s1469 = sadd.s32 %s1467, %s1468
        %s1470 = smul.addr %s1469, 8
        %s1471 = scalar_lea.vmem %s3, %s1470
      $region44: #{tpu_custom_call.1} parent=39 // pred_fallthru
        _
    $region40: #{tpu_custom_call.1} parent=5 // pred_fallthru
      _
  $region6: #{tpu_custom_call.1} parent=0 // loop_footer
    %s13 = sadd.s32 1, %s9
  $region7: #{tpu_custom_call.1} parent=0 // loop_footer_branch
    %8 = sbr.rel target = $region3
  $region8: #{tpu_custom_call.1} parent=0 // loop_exit
    _

// kernel: tpu_custom_call.1
$region0: #{tpu_custom_call.1}
  #allocation0 [shape = 'u32[]', space=smem, size = 0x4, offset = 0x4, fixed_abs, tag = 'smem constant byte address 0x4 - core index']
  #allocation1 [shape = 'u32[72,128]{1,0:T(1,128)}', space=vmem, size = 0x9000, scoped, tag = 'internal scratch']
  %s0 = inlined_call_operand.vmem [shape: f32[1,672,49], index: 0, kind: input, shape index: {}]
  %s1 = inlined_call_operand.vmem [shape: f32[672,1], index: 1, kind: input, shape index: {}]
  %s2 = inlined_call_operand.vmem [shape: bf16[192,672], index: 2, kind: input, shape index: {}]
  %s3 = inlined_call_operand.vmem [shape: f32[1,192,49], index: 3, kind: output, shape index: {}]
  %s4 = sld [smem:[#allocation0]]
  $region45: #{tpu_custom_call.1} parent=0
    _
  %s6 = ssub.s32 1, %s4
  %s7 = scalar_select 0, %s6, %s4
  loop: start=0, step=1, limit=4
  $region2: #{tpu_custom_call.1} parent=0 // loop_pre_header
    _
  $region3: #{tpu_custom_call.1} parent=0 // loop_header
    %s9 = sphi 0, %s13
    %p10 = scmp.ge.s32.totalorder %s9, 4
    %s16 = sphi 0, %s35
    %s17 = sphi 0, %s31
    %s18 = sphi 0, %s27
    %s19 = sphi 0, %s16
    %s20 = sphi 0, %s17
    %s21 = sphi 0, %s18
    %s22 = sphi 0, %s19
    %s23 = sphi 0, %s20
    %s24 = sphi 0, %s21
    %s40 = sphi 0, %s42
    %s43 = sphi 0, %s40
    %s44 = sphi 0, %s43
    %s60 = sphi 0, %s44
    %s64 = sphi 0, %s64
    %s66 = sphi 0, %s64
    %s67 = sphi 0, %s66
    %s81 = sphi 0, %s67
    %s87 = sphi 0, %s89
    %s90 = sphi 0, %s87
    %s91 = sphi 0, %s90
    %s107 = sphi 0, %s91
    %s117 = sphi 0, %s119
    %s120 = sphi 0, %s117
    %s121 = sphi 0, %s120
    %s137 = sphi 0, %s121
  $region4: #{tpu_custom_call.1} parent=0 // loop_header_branch
    %12 = sbr.rel (%p10) target = $region8
  $region5: #{tpu_custom_call.1} parent=0 // loop_body
    %s14 = ssub.s32 %s9, 1
    %s15 = ssub.s32 %s9, 2
    %s25 = sadd.s32 1, %s18
    %p26 = scmp.ge.s32.totalorder %s25, 1
    %s27 = scalar_select %p26, 0, %s25
    %s28 = sadd.s32 1, %s17
    %s29 = scalar_select %p26, %s28, %s17
    %p30 = scmp.ge.s32.totalorder %s29, 2
    %s31 = scalar_select %p30, 0, %s29
    %s32 = sadd.s32 1, %s16
    %s33 = scalar_select %p30, %s32, %s16
    %p34 = scmp.ge.s32.totalorder %s33, 1
    %s35 = scalar_select %p34, 0, %s33
    %s36 = ssub.s32 %s16, %s35
    %s37 = ssub.s32 %s18, %s27
    %s38 = sor.u32 %s36, %s37
    %p39 = scmp.eq.s32.totalorder %s38, 0
    %s41 = sadd.s32 %s40, 1
    %s42 = scalar_select %p39, %s40, %s41
    %p45 = pneg %p39
    %p46 = scmp.eq.s32.totalorder %s9, 1
    %p47 = por %p45, %p46
    %p48 = scmp.ne.s32.totalorder %s40, %s43
    %p49 = scmp.eq.s32.totalorder %s9, 0
    %p50 = por %p48, %p49
    %p51 = scmp.ne.s32.totalorder %s40, %s43
    %p52 = scmp.eq.s32.totalorder %s14, 1
    %p53 = por %p51, %p52
    %p54 = scmp.ne.s32.totalorder %s43, %s44
    %p55 = scmp.eq.s32.totalorder %s14, 0
    %p56 = por %p54, %p55
    %p57 = scmp.ne.s32.totalorder %s43, %s44
    %p58 = scmp.eq.s32.totalorder %s15, 1
    %p59 = por %p57, %p58
    %p61 = scmp.ne.s32.totalorder %s44, %s60
    %p62 = scmp.eq.s32.totalorder %s15, 0
    %p63 = por %p61, %p62
    %s65 = sadd.s32 %s64, 1
    %p68 = scmp.eq.s32.totalorder %s9, 1
    %p69 = scmp.ne.s32.totalorder %s64, %s66
    %p70 = scmp.eq.s32.totalorder %s9, 0
    %p71 = por %p69, %p70
    %p72 = scmp.ne.s32.totalorder %s64, %s66
    %p73 = scmp.eq.s32.totalorder %s14, 1
    %p74 = por %p72, %p73
    %p75 = scmp.ne.s32.totalorder %s66, %s67
    %p76 = scmp.eq.s32.totalorder %s14, 0
    %p77 = por %p75, %p76
    %p78 = scmp.ne.s32.totalorder %s66, %s67
    %p79 = scmp.eq.s32.totalorder %s15, 1
    %p80 = por %p78, %p79
    %p82 = scmp.ne.s32.totalorder %s67, %s81
    %p83 = scmp.eq.s32.totalorder %s15, 0
    %p84 = por %p82, %p83
    %s85 = ssub.s32 %s17, %s31
    %p86 = scmp.eq.s32.totalorder %s85, 0
    %s88 = sadd.s32 %s87, 1
    %s89 = scalar_select %p86, %s87, %s88
    %p92 = pneg %p86
    %p93 = scmp.eq.s32.totalorder %s9, 1
    %p94 = por %p92, %p93
    %p95 = scmp.ne.s32.totalorder %s87, %s90
    %p96 = scmp.eq.s32.totalorder %s9, 0
    %p97 = por %p95, %p96
    %p98 = scmp.ne.s32.totalorder %s87, %s90
    %p99 = scmp.eq.s32.totalorder %s14, 1
    %p100 = por %p98, %p99
    %p101 = scmp.ne.s32.totalorder %s90, %s91
    %p102 = scmp.eq.s32.totalorder %s14, 0
    %p103 = por %p101, %p102
    %p104 = scmp.ne.s32.totalorder %s90, %s91
    %p105 = scmp.eq.s32.totalorder %s15, 1
    %p106 = por %p104, %p105
    %p108 = scmp.ne.s32.totalorder %s91, %s107
    %p109 = scmp.eq.s32.totalorder %s15, 0
    %p110 = por %p108, %p109
    %s111 = ssub.s32 %s16, %s35
    %s112 = ssub.s32 %s17, %s31
    %s113 = sor.u32 %s111, %s112
    %s114 = ssub.s32 %s18, %s27
    %s115 = sor.u32 %s113, %s114
    %p116 = scmp.eq.s32.totalorder %s115, 0
    %s118 = sadd.s32 %s117, 1
    %s119 = scalar_select %p116, %s117, %s118
    %p122 = pneg %p116
    %p123 = scmp.eq.s32.totalorder %s9, 1
    %p124 = por %p122, %p123
    %p125 = scmp.ne.s32.totalorder %s117, %s120
    %p126 = scmp.eq.s32.totalorder %s9, 0
    %p127 = por %p125, %p126
    %p128 = scmp.ne.s32.totalorder %s117, %s120
    %p129 = scmp.eq.s32.totalorder %s14, 1
    %p130 = por %p128, %p129
    %p131 = scmp.ne.s32.totalorder %s120, %s121
    %p132 = scmp.eq.s32.totalorder %s14, 0
    %p133 = por %p131, %p132
    %p134 = scmp.ne.s32.totalorder %s120, %s121
    %p135 = scmp.eq.s32.totalorder %s15, 1
    %p136 = por %p134, %p135
    %p138 = scmp.ne.s32.totalorder %s121, %s137
    %p139 = scmp.eq.s32.totalorder %s15, 0
    %p140 = por %p138, %p139
    %p141 = scmp.le.s32.totalorder 1, %s9
    %p142 = scmp.lt.s32.totalorder %s9, 3
    %p143 = pnand %p141, %p142
    %p144 = pneg %p143
    // Predicated region
    $region9: #{tpu_custom_call.1} parent=5 // pred_check
      _
    $region10: #{tpu_custom_call.1} parent=5 // pred_check_branch
      %146 = sbr.rel (%p143) target = $region12
    $region11: #{tpu_custom_call.1} parent=5 // pred_region
      %s147 = ssub.s32 %s9, 1
      // Predicated region
      $region13: #{tpu_custom_call.1} parent=11 // pred_check
        %p148 = pneg %p56
      $region14: #{tpu_custom_call.1} parent=11 // pred_check_branch
        %150 = sbr.rel (%p148) target = $region16
      $region15: #{tpu_custom_call.1} parent=11 // pred_region
        %p151 = scmp.lt.s32.totalorder %s19, 0
        %s152 = scalar_select %p151, %s19, 0
        %p153 = scmp.lt.s32.totalorder %s21, 0
        %s154 = scalar_select %p153, %s21, 0
        %s155 = smul.addr %s152, 84
        %s156 = sadd.s32 %s154, %s155
        %s157 = smul.addr %s156, 8
        %s158 = scalar_lea.vmem %s0, %s157
      $region16: #{tpu_custom_call.1} parent=11 // pred_fallthru
        _
      // Predicated region
      $region17: #{tpu_custom_call.1} parent=11 // pred_check
        %p159 = pneg %p77
      $region18: #{tpu_custom_call.1} parent=11 // pred_check_branch
        %161 = sbr.rel (%p159) target = $region20
      $region19: #{tpu_custom_call.1} parent=11 // pred_region
        _
      $region20: #{tpu_custom_call.1} parent=11 // pred_fallthru
        _
    $region12: #{tpu_custom_call.1} parent=5 // pred_fallthru
      _
    %p162 = scmp.lt.s32.totalorder %s9, 2
    // Predicated region
    $region21: #{tpu_custom_call.1} parent=5 // pred_check
      %p163 = pneg %p162
    $region22: #{tpu_custom_call.1} parent=5 // pred_check_branch
      %165 = sbr.rel (%p163) target = $region24
    $region23: #{tpu_custom_call.1} parent=5 // pred_region
      // Predicated region
      $region25: #{tpu_custom_call.1} parent=23 // pred_check
        %p166 = pneg %p97
      $region26: #{tpu_custom_call.1} parent=23 // pred_check_branch
        %168 = sbr.rel (%p166) target = $region28
      $region27: #{tpu_custom_call.1} parent=23 // pred_region
        %s169 = smul.u32 12, %s17
        %p170 = scmp.lt.s32.totalorder %s169, 23
        %s171 = scalar_select %p170, %s169, 23
        %s172 = smul.addr %s171, 6
        %s173 = smul.addr %s172, 4
        %s174 = scalar_lea.vmem %s2, %s173
        %s175 = smul.u32 12, %s17
      $region28: #{tpu_custom_call.1} parent=23 // pred_fallthru
        _
    $region24: #{tpu_custom_call.1} parent=5 // pred_fallthru
      _
    %p176 = scmp.le.s32.totalorder 1, %s9
    %p177 = scmp.lt.s32.totalorder %s9, 3
    %p178 = pnand %p176, %p177
    %p179 = pneg %p178
    // Predicated region
    $region29: #{tpu_custom_call.1} parent=5 // pred_check
      _
    $region30: #{tpu_custom_call.1} parent=5 // pred_check_branch
      %181 = sbr.rel (%p178) target = $region32
    $region31: #{tpu_custom_call.1} parent=5 // pred_region
      %s182 = ssub.s32 %s9, 1
      %p183 = scmp.lt.s32.totalorder %s19, 0
      %s184 = scalar_select %p183, %s19, 0
      %p185 = scmp.lt.s32.totalorder %s21, 0
      %s186 = scalar_select %p185, %s21, 0
      %s187 = smul.addr %s184, 84
      %s188 = sadd.s32 %s186, %s187
      %s189 = smul.addr %s188, 8
      %s190 = scalar_lea.vmem %s0, %s189
      %p191 = pneg %p56
      %p192 = pneg %p53
      %p193 = pneg %p77
      %p194 = pneg %p74
      %s195 = smul.u32 12, %s20
      %p196 = scmp.lt.s32.totalorder %s195, 23
      %s197 = scalar_select %p196, %s195, 23
      %s198 = smul.addr %s197, 6
      %s199 = smul.addr %s198, 4
      %s200 = scalar_lea.vmem %s2, %s199
      %p201 = pneg %p103
      %p202 = pneg %p100
      %p203 = pneg %p133
      %p204 = pneg %p130
      %s205 = smul.u32 12, %s20
      %p206 = scmp.lt.s32.totalorder %s19, 0
      %s207 = scalar_select %p206, %s19, 0
      %p208 = scmp.lt.s32.totalorder %s205, 23
      %s209 = scalar_select %p208, %s205, 23
      %p210 = scmp.lt.s32.totalorder %s21, 0
      %s211 = scalar_select %p210, %s21, 0
      %s212 = sadd.s32 %s211, %s209
      %s213 = smul.addr %s207, 24
      %s214 = sadd.s32 %s212, %s213
      %s215 = smul.addr %s214, 8
      %s216 = scalar_lea.vmem %s3, %s215
      %p217 = scmp.lt.s32.totalorder %s19, 0
      %s218 = scalar_select %p217, %s19, 0
      %p219 = scmp.lt.s32.totalorder %s21, 0
      %s220 = scalar_select %p219, %s21, 0
      %s221 = smul.addr %s218, 84
      %s222 = sadd.s32 %s220, %s221
      %s223 = smul.addr %s222, 8
      %s224 = scalar_lea.vmem %s0, %s223
      %s225 = smul.u32 12, %s20
      %p226 = scmp.lt.s32.totalorder %s225, 23
      %s227 = scalar_select %p226, %s225, 23
      %s228 = smul.addr %s227, 6
      %s229 = smul.addr %s228, 4
      %s230 = scalar_lea.vmem %s2, %s229
      %s231 = smul.u32 12, %s20
      %s232 = smul.u32 12, %s20
      %p233 = scmp.lt.s32.totalorder %s19, 0
      %s234 = scalar_select %p233, %s19, 0
      %p235 = scmp.lt.s32.totalorder %s232, 23
      %s236 = scalar_select %p235, %s232, 23
      %p237 = scmp.lt.s32.totalorder %s21, 0
      %s238 = scalar_select %p237, %s21, 0
      %s239 = sadd.s32 %s238, %s236
      %s240 = smul.addr %s234, 24
      %s241 = sadd.s32 %s239, %s240
      %s242 = smul.addr %s241, 8
      %s243 = scalar_lea.vmem %s3, %s242
      %s244 = smul.u32 12, %s20
      %v246 = vld [vmem:[%s224] sm:$0xff]
      %v247 = vld [vmem:[%s224 + $0x8] sm:$0xff]
      %v248 = vld [vmem:[%s224 + $0x10] sm:$0xff]
      %v249 = vld [vmem:[%s224 + $0x18] sm:$0xff]
      %v250 = vld [vmem:[%s224 + $0x20] sm:$0xff]
      %v251 = vld [vmem:[%s224 + $0x28] sm:$0xff]
      %v252 = vld [vmem:[%s224 + $0x30] sm:$0xff]
      %v253 = vld [vmem:[%s224 + $0x38] sm:$0xff]
      %v254 = vld [vmem:[%s224 + $0x40] sm:$0xff]
      %v255 = vld [vmem:[%s224 + $0x48] sm:$0xff]
      %v256 = vld [vmem:[%s224 + $0x50] sm:$0xff]
      %v257 = vld [vmem:[%s224 + $0x58] sm:$0xff]
      %v258 = vld [vmem:[%s224 + $0x60] sm:$0xff]
      %v259 = vld [vmem:[%s224 + $0x68] sm:$0xff]
      %v260 = vld [vmem:[%s224 + $0x70] sm:$0xff]
      %v261 = vld [vmem:[%s224 + $0x78] sm:$0xff]
      %v262 = vld [vmem:[%s224 + $0x80] sm:$0xff]
      %v263 = vld [vmem:[%s224 + $0x88] sm:$0xff]
      %v264 = vld [vmem:[%s224 + $0x90] sm:$0xff]
      %v265 = vld [vmem:[%s224 + $0x98] sm:$0xff]
      %v266 = vld [vmem:[%s224 + $0xa0] sm:$0xff]
      %v267 = vld [vmem:[%s224 + $0xa8] sm:$0xff]
      %v268 = vld [vmem:[%s224 + $0xb0] sm:$0xff]
      %v269 = vld [vmem:[%s224 + $0xb8] sm:$0xff]
      %v270 = vld [vmem:[%s224 + $0xc0] sm:$0xff]
      %v271 = vld [vmem:[%s224 + $0xc8] sm:$0xff]
      %v272 = vld [vmem:[%s224 + $0xd0] sm:$0xff]
      %v273 = vld [vmem:[%s224 + $0xd8] sm:$0xff]
      %v274 = vld [vmem:[%s224 + $0xe0] sm:$0xff]
      %v275 = vld [vmem:[%s224 + $0xe8] sm:$0xff]
      %v276 = vld [vmem:[%s224 + $0xf0] sm:$0xff]
      %v277 = vld [vmem:[%s224 + $0xf8] sm:$0xff]
      %v278 = vld [vmem:[%s224 + $0x100] sm:$0xff]
      %v279 = vld [vmem:[%s224 + $0x108] sm:$0xff]
      %v280 = vld [vmem:[%s224 + $0x110] sm:$0xff]
      %v281 = vld [vmem:[%s224 + $0x118] sm:$0xff]
      %v282 = vld [vmem:[%s224 + $0x120] sm:$0xff]
      %v283 = vld [vmem:[%s224 + $0x128] sm:$0xff]
      %v284 = vld [vmem:[%s224 + $0x130] sm:$0xff]
      %v285 = vld [vmem:[%s224 + $0x138] sm:$0xff]
      %v286 = vld [vmem:[%s224 + $0x140] sm:$0xff]
      %v287 = vld [vmem:[%s224 + $0x148] sm:$0xff]
      %v288 = vld [vmem:[%s224 + $0x150] sm:$0xff]
      %v289 = vld [vmem:[%s224 + $0x158] sm:$0xff]
      %v290 = vld [vmem:[%s224 + $0x160] sm:$0xff]
      %v291 = vld [vmem:[%s224 + $0x168] sm:$0xff]
      %v292 = vld [vmem:[%s224 + $0x170] sm:$0xff]
      %v293 = vld [vmem:[%s224 + $0x178] sm:$0xff]
      %v294 = vld [vmem:[%s224 + $0x180] sm:$0xff]
      %v295 = vld [vmem:[%s224 + $0x188] sm:$0xff]
      %v296 = vld [vmem:[%s224 + $0x190] sm:$0xff]
      %v297 = vld [vmem:[%s224 + $0x198] sm:$0xff]
      %v298 = vld [vmem:[%s224 + $0x1a0] sm:$0xff]
      %v299 = vld [vmem:[%s224 + $0x1a8] sm:$0xff]
      %v300 = vld [vmem:[%s224 + $0x1b0] sm:$0xff]
      %v301 = vld [vmem:[%s224 + $0x1b8] sm:$0xff]
      %v302 = vld [vmem:[%s224 + $0x1c0] sm:$0xff]
      %v303 = vld [vmem:[%s224 + $0x1c8] sm:$0xff]
      %v304 = vld [vmem:[%s224 + $0x1d0] sm:$0xff]
      %v305 = vld [vmem:[%s224 + $0x1d8] sm:$0xff]
      %v306 = vld [vmem:[%s224 + $0x1e0] sm:$0xff]
      %v307 = vld [vmem:[%s224 + $0x1e8] sm:$0xff]
      %v308 = vld [vmem:[%s224 + $0x1f0] sm:$0xff]
      %v309 = vld [vmem:[%s224 + $0x1f8] sm:$0xff]
      %v310 = vld [vmem:[%s224 + $0x200] sm:$0xff]
      %v311 = vld [vmem:[%s224 + $0x208] sm:$0xff]
      %v312 = vld [vmem:[%s224 + $0x210] sm:$0xff]
      %v313 = vld [vmem:[%s224 + $0x218] sm:$0xff]
      %v314 = vld [vmem:[%s224 + $0x220] sm:$0xff]
      %v315 = vld [vmem:[%s224 + $0x228] sm:$0xff]
      %v316 = vld [vmem:[%s224 + $0x230] sm:$0xff]
      %v317 = vld [vmem:[%s224 + $0x238] sm:$0xff]
      %v318 = vld [vmem:[%s224 + $0x240] sm:$0xff]
      %v319 = vld [vmem:[%s224 + $0x248] sm:$0xff]
      %v320 = vld [vmem:[%s224 + $0x250] sm:$0xff]
      %v321 = vld [vmem:[%s224 + $0x258] sm:$0xff]
      %v322 = vld [vmem:[%s224 + $0x260] sm:$0xff]
      %v323 = vld [vmem:[%s224 + $0x268] sm:$0xff]
      %v324 = vld [vmem:[%s224 + $0x270] sm:$0xff]
      %v325 = vld [vmem:[%s224 + $0x278] sm:$0xff]
      %v326 = vld [vmem:[%s224 + $0x280] sm:$0xff]
      %v327 = vld [vmem:[%s224 + $0x288] sm:$0xff]
      %v328 = vld [vmem:[%s224 + $0x290] sm:$0xff]
      %v329 = vld [vmem:[%s224 + $0x298] sm:$0xff]
      %v330 = vld [vmem:[%s1] sm:$0xff]
      %v331 = vld [vmem:[%s1 + $0x8] sm:$0xff]
      %v332 = vld [vmem:[%s1 + $0x10] sm:$0xff]
      %v333 = vld [vmem:[%s1 + $0x18] sm:$0xff]
      %v334 = vld [vmem:[%s1 + $0x20] sm:$0xff]
      %v335 = vld [vmem:[%s1 + $0x28] sm:$0xff]
      %v336 = vld [vmem:[%s1 + $0x30] sm:$0xff]
      %v337 = vld [vmem:[%s1 + $0x38] sm:$0xff]
      %v338 = vld [vmem:[%s1 + $0x40] sm:$0xff]
      %v339 = vld [vmem:[%s1 + $0x48] sm:$0xff]
      %v340 = vld [vmem:[%s1 + $0x50] sm:$0xff]
      %v341 = vld [vmem:[%s1 + $0x58] sm:$0xff]
      %v342 = vld [vmem:[%s1 + $0x60] sm:$0xff]
      %v343 = vld [vmem:[%s1 + $0x68] sm:$0xff]
      %v344 = vld [vmem:[%s1 + $0x70] sm:$0xff]
      %v345 = vld [vmem:[%s1 + $0x78] sm:$0xff]
      %v346 = vld [vmem:[%s1 + $0x80] sm:$0xff]
      %v347 = vld [vmem:[%s1 + $0x88] sm:$0xff]
      %v348 = vld [vmem:[%s1 + $0x90] sm:$0xff]
      %v349 = vld [vmem:[%s1 + $0x98] sm:$0xff]
      %v350 = vld [vmem:[%s1 + $0xa0] sm:$0xff]
      %v351 = vld [vmem:[%s1 + $0xa8] sm:$0xff]
      %v352 = vld [vmem:[%s1 + $0xb0] sm:$0xff]
      %v353 = vld [vmem:[%s1 + $0xb8] sm:$0xff]
      %v354 = vld [vmem:[%s1 + $0xc0] sm:$0xff]
      %v355 = vld [vmem:[%s1 + $0xc8] sm:$0xff]
      %v356 = vld [vmem:[%s1 + $0xd0] sm:$0xff]
      %v357 = vld [vmem:[%s1 + $0xd8] sm:$0xff]
      %v358 = vld [vmem:[%s1 + $0xe0] sm:$0xff]
      %v359 = vld [vmem:[%s1 + $0xe8] sm:$0xff]
      %v360 = vld [vmem:[%s1 + $0xf0] sm:$0xff]
      %v361 = vld [vmem:[%s1 + $0xf8] sm:$0xff]
      %v362 = vld [vmem:[%s1 + $0x100] sm:$0xff]
      %v363 = vld [vmem:[%s1 + $0x108] sm:$0xff]
      %v364 = vld [vmem:[%s1 + $0x110] sm:$0xff]
      %v365 = vld [vmem:[%s1 + $0x118] sm:$0xff]
      %v366 = vld [vmem:[%s1 + $0x120] sm:$0xff]
      %v367 = vld [vmem:[%s1 + $0x128] sm:$0xff]
      %v368 = vld [vmem:[%s1 + $0x130] sm:$0xff]
      %v369 = vld [vmem:[%s1 + $0x138] sm:$0xff]
      %v370 = vld [vmem:[%s1 + $0x140] sm:$0xff]
      %v371 = vld [vmem:[%s1 + $0x148] sm:$0xff]
      %v372 = vld [vmem:[%s1 + $0x150] sm:$0xff]
      %v373 = vld [vmem:[%s1 + $0x158] sm:$0xff]
      %v374 = vld [vmem:[%s1 + $0x160] sm:$0xff]
      %v375 = vld [vmem:[%s1 + $0x168] sm:$0xff]
      %v376 = vld [vmem:[%s1 + $0x170] sm:$0xff]
      %v377 = vld [vmem:[%s1 + $0x178] sm:$0xff]
      %v378 = vld [vmem:[%s1 + $0x180] sm:$0xff]
      %v379 = vld [vmem:[%s1 + $0x188] sm:$0xff]
      %v380 = vld [vmem:[%s1 + $0x190] sm:$0xff]
      %v381 = vld [vmem:[%s1 + $0x198] sm:$0xff]
      %v382 = vld [vmem:[%s1 + $0x1a0] sm:$0xff]
      %v383 = vld [vmem:[%s1 + $0x1a8] sm:$0xff]
      %v384 = vld [vmem:[%s1 + $0x1b0] sm:$0xff]
      %v385 = vld [vmem:[%s1 + $0x1b8] sm:$0xff]
      %v386 = vld [vmem:[%s1 + $0x1c0] sm:$0xff]
      %v387 = vld [vmem:[%s1 + $0x1c8] sm:$0xff]
      %v388 = vld [vmem:[%s1 + $0x1d0] sm:$0xff]
      %v389 = vld [vmem:[%s1 + $0x1d8] sm:$0xff]
      %v390 = vld [vmem:[%s1 + $0x1e0] sm:$0xff]
      %v391 = vld [vmem:[%s1 + $0x1e8] sm:$0xff]
      %v392 = vld [vmem:[%s1 + $0x1f0] sm:$0xff]
      %v393 = vld [vmem:[%s1 + $0x1f8] sm:$0xff]
      %v394 = vld [vmem:[%s1 + $0x200] sm:$0xff]
      %v395 = vld [vmem:[%s1 + $0x208] sm:$0xff]
      %v396 = vld [vmem:[%s1 + $0x210] sm:$0xff]
      %v397 = vld [vmem:[%s1 + $0x218] sm:$0xff]
      %v398 = vld [vmem:[%s1 + $0x220] sm:$0xff]
      %v399 = vld [vmem:[%s1 + $0x228] sm:$0xff]
      %v400 = vld [vmem:[%s1 + $0x230] sm:$0xff]
      %v401 = vld [vmem:[%s1 + $0x238] sm:$0xff]
      %v402 = vld [vmem:[%s1 + $0x240] sm:$0xff]
      %v403 = vld [vmem:[%s1 + $0x248] sm:$0xff]
      %v404 = vld [vmem:[%s1 + $0x250] sm:$0xff]
      %v405 = vld [vmem:[%s1 + $0x258] sm:$0xff]
      %v406 = vld [vmem:[%s1 + $0x260] sm:$0xff]
      %v407 = vld [vmem:[%s1 + $0x268] sm:$0xff]
      %v408 = vld [vmem:[%s1 + $0x270] sm:$0xff]
      %v409 = vld [vmem:[%s1 + $0x278] sm:$0xff]
      %v410 = vld [vmem:[%s1 + $0x280] sm:$0xff]
      %v411 = vld [vmem:[%s1 + $0x288] sm:$0xff]
      %v412 = vld [vmem:[%s1 + $0x290] sm:$0xff]
      %v413 = vld [vmem:[%s1 + $0x298] sm:$0xff]
      %415 = vset.pattern.permute.xlu0 0
      %416 = vperm.xlu0 %415, %v330
      %v417 = vpop.permute.xlu0 %416
      %420 = vset.pattern.permute.xlu0 0
      %421 = vperm.xlu0 %420, %v331
      %v422 = vpop.permute.xlu0 %421
      %425 = vset.pattern.permute.xlu0 0
      %426 = vperm.xlu0 %425, %v332
      %v427 = vpop.permute.xlu0 %426
      %430 = vset.pattern.permute.xlu0 0
      %431 = vperm.xlu0 %430, %v333
      %v432 = vpop.permute.xlu0 %431
      %435 = vset.pattern.permute.xlu0 0
      %436 = vperm.xlu0 %435, %v334
      %v437 = vpop.permute.xlu0 %436
      %440 = vset.pattern.permute.xlu0 0
      %441 = vperm.xlu0 %440, %v335
      %v442 = vpop.permute.xlu0 %441
      %445 = vset.pattern.permute.xlu0 0
      %446 = vperm.xlu0 %445, %v336
      %v447 = vpop.permute.xlu0 %446
      %450 = vset.pattern.permute.xlu0 0
      %451 = vperm.xlu0 %450, %v337
      %v452 = vpop.permute.xlu0 %451
      %455 = vset.pattern.permute.xlu0 0
      %456 = vperm.xlu0 %455, %v338
      %v457 = vpop.permute.xlu0 %456
      %460 = vset.pattern.permute.xlu0 0
      %461 = vperm.xlu0 %460, %v339
      %v462 = vpop.permute.xlu0 %461
      %465 = vset.pattern.permute.xlu0 0
      %466 = vperm.xlu0 %465, %v340
      %v467 = vpop.permute.xlu0 %466
      %470 = vset.pattern.permute.xlu0 0
      %471 = vperm.xlu0 %470, %v341
      %v472 = vpop.permute.xlu0 %471
      %475 = vset.pattern.permute.xlu0 0
      %476 = vperm.xlu0 %475, %v342
      %v477 = vpop.permute.xlu0 %476
      %480 = vset.pattern.permute.xlu0 0
      %481 = vperm.xlu0 %480, %v343
      %v482 = vpop.permute.xlu0 %481
      %485 = vset.pattern.permute.xlu0 0
      %486 = vperm.xlu0 %485, %v344
      %v487 = vpop.permute.xlu0 %486
      %490 = vset.pattern.permute.xlu0 0
      %491 = vperm.xlu0 %490, %v345
      %v492 = vpop.permute.xlu0 %491
      %495 = vset.pattern.permute.xlu0 0
      %496 = vperm.xlu0 %495, %v346
      %v497 = vpop.permute.xlu0 %496
      %500 = vset.pattern.permute.xlu0 0
      %501 = vperm.xlu0 %500, %v347
      %v502 = vpop.permute.xlu0 %501
      %505 = vset.pattern.permute.xlu0 0
      %506 = vperm.xlu0 %505, %v348
      %v507 = vpop.permute.xlu0 %506
      %510 = vset.pattern.permute.xlu0 0
      %511 = vperm.xlu0 %510, %v349
      %v512 = vpop.permute.xlu0 %511
      %515 = vset.pattern.permute.xlu0 0
      %516 = vperm.xlu0 %515, %v350
      %v517 = vpop.permute.xlu0 %516
      %520 = vset.pattern.permute.xlu0 0
      %521 = vperm.xlu0 %520, %v351
      %v522 = vpop.permute.xlu0 %521
      %525 = vset.pattern.permute.xlu0 0
      %526 = vperm.xlu0 %525, %v352
      %v527 = vpop.permute.xlu0 %526
      %530 = vset.pattern.permute.xlu0 0
      %531 = vperm.xlu0 %530, %v353
      %v532 = vpop.permute.xlu0 %531
      %535 = vset.pattern.permute.xlu0 0
      %536 = vperm.xlu0 %535, %v354
      %v537 = vpop.permute.xlu0 %536
      %540 = vset.pattern.permute.xlu0 0
      %541 = vperm.xlu0 %540, %v355
      %v542 = vpop.permute.xlu0 %541
      %545 = vset.pattern.permute.xlu0 0
      %546 = vperm.xlu0 %545, %v356
      %v547 = vpop.permute.xlu0 %546
      %550 = vset.pattern.permute.xlu0 0
      %551 = vperm.xlu0 %550, %v357
      %v552 = vpop.permute.xlu0 %551
      %555 = vset.pattern.permute.xlu0 0
      %556 = vperm.xlu0 %555, %v358
      %v557 = vpop.permute.xlu0 %556
      %560 = vset.pattern.permute.xlu0 0
      %561 = vperm.xlu0 %560, %v359
      %v562 = vpop.permute.xlu0 %561
      %565 = vset.pattern.permute.xlu0 0
      %566 = vperm.xlu0 %565, %v360
      %v567 = vpop.permute.xlu0 %566
      %570 = vset.pattern.permute.xlu0 0
      %571 = vperm.xlu0 %570, %v361
      %v572 = vpop.permute.xlu0 %571
      %575 = vset.pattern.permute.xlu0 0
      %576 = vperm.xlu0 %575, %v362
      %v577 = vpop.permute.xlu0 %576
      %580 = vset.pattern.permute.xlu0 0
      %581 = vperm.xlu0 %580, %v363
      %v582 = vpop.permute.xlu0 %581
      %585 = vset.pattern.permute.xlu0 0
      %586 = vperm.xlu0 %585, %v364
      %v587 = vpop.permute.xlu0 %586
      %590 = vset.pattern.permute.xlu0 0
      %591 = vperm.xlu0 %590, %v365
      %v592 = vpop.permute.xlu0 %591
      %595 = vset.pattern.permute.xlu0 0
      %596 = vperm.xlu0 %595, %v366
      %v597 = vpop.permute.xlu0 %596
      %600 = vset.pattern.permute.xlu0 0
      %601 = vperm.xlu0 %600, %v367
      %v602 = vpop.permute.xlu0 %601
      %605 = vset.pattern.permute.xlu0 0
      %606 = vperm.xlu0 %605, %v368
      %v607 = vpop.permute.xlu0 %606
      %610 = vset.pattern.permute.xlu0 0
      %611 = vperm.xlu0 %610, %v369
      %v612 = vpop.permute.xlu0 %611
      %615 = vset.pattern.permute.xlu0 0
      %616 = vperm.xlu0 %615, %v370
      %v617 = vpop.permute.xlu0 %616
      %620 = vset.pattern.permute.xlu0 0
      %621 = vperm.xlu0 %620, %v371
      %v622 = vpop.permute.xlu0 %621
      %625 = vset.pattern.permute.xlu0 0
      %626 = vperm.xlu0 %625, %v372
      %v627 = vpop.permute.xlu0 %626
      %630 = vset.pattern.permute.xlu0 0
      %631 = vperm.xlu0 %630, %v373
      %v632 = vpop.permute.xlu0 %631
      %635 = vset.pattern.permute.xlu0 0
      %636 = vperm.xlu0 %635, %v374
      %v637 = vpop.permute.xlu0 %636
      %640 = vset.pattern.permute.xlu0 0
      %641 = vperm.xlu0 %640, %v375
      %v642 = vpop.permute.xlu0 %641
      %645 = vset.pattern.permute.xlu0 0
      %646 = vperm.xlu0 %645, %v376
      %v647 = vpop.permute.xlu0 %646
      %650 = vset.pattern.permute.xlu0 0
      %651 = vperm.xlu0 %650, %v377
      %v652 = vpop.permute.xlu0 %651
      %655 = vset.pattern.permute.xlu0 0
      %656 = vperm.xlu0 %655, %v378
      %v657 = vpop.permute.xlu0 %656
      %660 = vset.pattern.permute.xlu0 0
      %661 = vperm.xlu0 %660, %v379
      %v662 = vpop.permute.xlu0 %661
      %665 = vset.pattern.permute.xlu0 0
      %666 = vperm.xlu0 %665, %v380
      %v667 = vpop.permute.xlu0 %666
      %670 = vset.pattern.permute.xlu0 0
      %671 = vperm.xlu0 %670, %v381
      %v672 = vpop.permute.xlu0 %671
      %675 = vset.pattern.permute.xlu0 0
      %676 = vperm.xlu0 %675, %v382
      %v677 = vpop.permute.xlu0 %676
      %680 = vset.pattern.permute.xlu0 0
      %681 = vperm.xlu0 %680, %v383
      %v682 = vpop.permute.xlu0 %681
      %685 = vset.pattern.permute.xlu0 0
      %686 = vperm.xlu0 %685, %v384
      %v687 = vpop.permute.xlu0 %686
      %690 = vset.pattern.permute.xlu0 0
      %691 = vperm.xlu0 %690, %v385
      %v692 = vpop.permute.xlu0 %691
      %695 = vset.pattern.permute.xlu0 0
      %696 = vperm.xlu0 %695, %v386
      %v697 = vpop.permute.xlu0 %696
      %700 = vset.pattern.permute.xlu0 0
      %701 = vperm.xlu0 %700, %v387
      %v702 = vpop.permute.xlu0 %701
      %705 = vset.pattern.permute.xlu0 0
      %706 = vperm.xlu0 %705, %v388
      %v707 = vpop.permute.xlu0 %706
      %710 = vset.pattern.permute.xlu0 0
      %711 = vperm.xlu0 %710, %v389
      %v712 = vpop.permute.xlu0 %711
      %715 = vset.pattern.permute.xlu0 0
      %716 = vperm.xlu0 %715, %v390
      %v717 = vpop.permute.xlu0 %716
      %720 = vset.pattern.permute.xlu0 0
      %721 = vperm.xlu0 %720, %v391
      %v722 = vpop.permute.xlu0 %721
      %725 = vset.pattern.permute.xlu0 0
      %726 = vperm.xlu0 %725, %v392
      %v727 = vpop.permute.xlu0 %726
      %730 = vset.pattern.permute.xlu0 0
      %731 = vperm.xlu0 %730, %v393
      %v732 = vpop.permute.xlu0 %731
      %735 = vset.pattern.permute.xlu0 0
      %736 = vperm.xlu0 %735, %v394
      %v737 = vpop.permute.xlu0 %736
      %740 = vset.pattern.permute.xlu0 0
      %741 = vperm.xlu0 %740, %v395
      %v742 = vpop.permute.xlu0 %741
      %745 = vset.pattern.permute.xlu0 0
      %746 = vperm.xlu0 %745, %v396
      %v747 = vpop.permute.xlu0 %746
      %750 = vset.pattern.permute.xlu0 0
      %751 = vperm.xlu0 %750, %v397
      %v752 = vpop.permute.xlu0 %751
      %755 = vset.pattern.permute.xlu0 0
      %756 = vperm.xlu0 %755, %v398
      %v757 = vpop.permute.xlu0 %756
      %760 = vset.pattern.permute.xlu0 0
      %761 = vperm.xlu0 %760, %v399
      %v762 = vpop.permute.xlu0 %761
      %765 = vset.pattern.permute.xlu0 0
      %766 = vperm.xlu0 %765, %v400
      %v767 = vpop.permute.xlu0 %766
      %770 = vset.pattern.permute.xlu0 0
      %771 = vperm.xlu0 %770, %v401
      %v772 = vpop.permute.xlu0 %771
      %775 = vset.pattern.permute.xlu0 0
      %776 = vperm.xlu0 %775, %v402
      %v777 = vpop.permute.xlu0 %776
      %780 = vset.pattern.permute.xlu0 0
      %781 = vperm.xlu0 %780, %v403
      %v782 = vpop.permute.xlu0 %781
      %785 = vset.pattern.permute.xlu0 0
      %786 = vperm.xlu0 %785, %v404
      %v787 = vpop.permute.xlu0 %786
      %790 = vset.pattern.permute.xlu0 0
      %791 = vperm.xlu0 %790, %v405
      %v792 = vpop.permute.xlu0 %791
      %795 = vset.pattern.permute.xlu0 0
      %796 = vperm.xlu0 %795, %v406
      %v797 = vpop.permute.xlu0 %796
      %800 = vset.pattern.permute.xlu0 0
      %801 = vperm.xlu0 %800, %v407
      %v802 = vpop.permute.xlu0 %801
      %805 = vset.pattern.permute.xlu0 0
      %806 = vperm.xlu0 %805, %v408
      %v807 = vpop.permute.xlu0 %806
      %810 = vset.pattern.permute.xlu0 0
      %811 = vperm.xlu0 %810, %v409
      %v812 = vpop.permute.xlu0 %811
      %815 = vset.pattern.permute.xlu0 0
      %816 = vperm.xlu0 %815, %v410
      %v817 = vpop.permute.xlu0 %816
      %820 = vset.pattern.permute.xlu0 0
      %821 = vperm.xlu0 %820, %v411
      %v822 = vpop.permute.xlu0 %821
      %825 = vset.pattern.permute.xlu0 0
      %826 = vperm.xlu0 %825, %v412
      %v827 = vpop.permute.xlu0 %826
      %830 = vset.pattern.permute.xlu0 0
      %831 = vperm.xlu0 %830, %v413
      %v832 = vpop.permute.xlu0 %831
      %v834 = vmul.f32 %v246, %v417
      %v835 = vmul.f32 %v247, %v422
      %v836 = vmul.f32 %v248, %v427
      %v837 = vmul.f32 %v249, %v432
      %v838 = vmul.f32 %v250, %v437
      %v839 = vmul.f32 %v251, %v442
      %v840 = vmul.f32 %v252, %v447
      %v841 = vmul.f32 %v253, %v452
      %v842 = vmul.f32 %v254, %v457
      %v843 = vmul.f32 %v255, %v462
      %v844 = vmul.f32 %v256, %v467
      %v845 = vmul.f32 %v257, %v472
      %v846 = vmul.f32 %v258, %v477
      %v847 = vmul.f32 %v259, %v482
      %v848 = vmul.f32 %v260, %v487
      %v849 = vmul.f32 %v261, %v492
      %v850 = vmul.f32 %v262, %v497
      %v851 = vmul.f32 %v263, %v502
      %v852 = vmul.f32 %v264, %v507
      %v853 = vmul.f32 %v265, %v512
      %v854 = vmul.f32 %v266, %v517
      %v855 = vmul.f32 %v267, %v522
      %v856 = vmul.f32 %v268, %v527
      %v857 = vmul.f32 %v269, %v532
      %v858 = vmul.f32 %v270, %v537
      %v859 = vmul.f32 %v271, %v542
      %v860 = vmul.f32 %v272, %v547
      %v861 = vmul.f32 %v273, %v552
      %v862 = vmul.f32 %v274, %v557
      %v863 = vmul.f32 %v275, %v562
      %v864 = vmul.f32 %v276, %v567
      %v865 = vmul.f32 %v277, %v572
      %v866 = vmul.f32 %v278, %v577
      %v867 = vmul.f32 %v279, %v582
      %v868 = vmul.f32 %v280, %v587
      %v869 = vmul.f32 %v281, %v592
      %v870 = vmul.f32 %v282, %v597
      %v871 = vmul.f32 %v283, %v602
      %v872 = vmul.f32 %v284, %v607
      %v873 = vmul.f32 %v285, %v612
      %v874 = vmul.f32 %v286, %v617
      %v875 = vmul.f32 %v287, %v622
      %v876 = vmul.f32 %v288, %v627
      %v877 = vmul.f32 %v289, %v632
      %v878 = vmul.f32 %v290, %v637
      %v879 = vmul.f32 %v291, %v642
      %v880 = vmul.f32 %v292, %v647
      %v881 = vmul.f32 %v293, %v652
      %v882 = vmul.f32 %v294, %v657
      %v883 = vmul.f32 %v295, %v662
      %v884 = vmul.f32 %v296, %v667
      %v885 = vmul.f32 %v297, %v672
      %v886 = vmul.f32 %v298, %v677
      %v887 = vmul.f32 %v299, %v682
      %v888 = vmul.f32 %v300, %v687
      %v889 = vmul.f32 %v301, %v692
      %v890 = vmul.f32 %v302, %v697
      %v891 = vmul.f32 %v303, %v702
      %v892 = vmul.f32 %v304, %v707
      %v893 = vmul.f32 %v305, %v712
      %v894 = vmul.f32 %v306, %v717
      %v895 = vmul.f32 %v307, %v722
      %v896 = vmul.f32 %v308, %v727
      %v897 = vmul.f32 %v309, %v732
      %v898 = vmul.f32 %v310, %v737
      %v899 = vmul.f32 %v311, %v742
      %v900 = vmul.f32 %v312, %v747
      %v901 = vmul.f32 %v313, %v752
      %v902 = vmul.f32 %v314, %v757
      %v903 = vmul.f32 %v315, %v762
      %v904 = vmul.f32 %v316, %v767
      %v905 = vmul.f32 %v317, %v772
      %v906 = vmul.f32 %v318, %v777
      %v907 = vmul.f32 %v319, %v782
      %v908 = vmul.f32 %v320, %v787
      %v909 = vmul.f32 %v321, %v792
      %v910 = vmul.f32 %v322, %v797
      %v911 = vmul.f32 %v323, %v802
      %v912 = vmul.f32 %v324, %v807
      %v913 = vmul.f32 %v325, %v812
      %v914 = vmul.f32 %v326, %v817
      %v915 = vmul.f32 %v327, %v822
      %v916 = vmul.f32 %v328, %v827
      %v917 = vmul.f32 %v329, %v832
      %v918 = vpack.c.bf16 %v835, %v834
      %v919 = vpack.c.bf16 %v837, %v836
      %v920 = vpack.c.bf16 %v839, %v838
      %v921 = vpack.c.bf16 %v841, %v840
      %v922 = vpack.c.bf16 %v843, %v842
      %v923 = vpack.c.bf16 %v845, %v844
      %v924 = vpack.c.bf16 %v847, %v846
      %v925 = vpack.c.bf16 %v849, %v848
      %v926 = vpack.c.bf16 %v851, %v850
      %v927 = vpack.c.bf16 %v853, %v852
      %v928 = vpack.c.bf16 %v855, %v854
      %v929 = vpack.c.bf16 %v857, %v856
      %v930 = vpack.c.bf16 %v859, %v858
      %v931 = vpack.c.bf16 %v861, %v860
      %v932 = vpack.c.bf16 %v863, %v862
      %v933 = vpack.c.bf16 %v865, %v864
      %v934 = vpack.c.bf16 %v867, %v866
      %v935 = vpack.c.bf16 %v869, %v868
      %v936 = vpack.c.bf16 %v871, %v870
      %v937 = vpack.c.bf16 %v873, %v872
      %v938 = vpack.c.bf16 %v875, %v874
      %v939 = vpack.c.bf16 %v877, %v876
      %v940 = vpack.c.bf16 %v879, %v878
      %v941 = vpack.c.bf16 %v881, %v880
      %v942 = vpack.c.bf16 %v883, %v882
      %v943 = vpack.c.bf16 %v885, %v884
      %v944 = vpack.c.bf16 %v887, %v886
      %v945 = vpack.c.bf16 %v889, %v888
      %v946 = vpack.c.bf16 %v891, %v890
      %v947 = vpack.c.bf16 %v893, %v892
      %v948 = vpack.c.bf16 %v895, %v894
      %v949 = vpack.c.bf16 %v897, %v896
      %v950 = vpack.c.bf16 %v899, %v898
      %v951 = vpack.c.bf16 %v901, %v900
      %v952 = vpack.c.bf16 %v903, %v902
      %v953 = vpack.c.bf16 %v905, %v904
      %v954 = vpack.c.bf16 %v907, %v906
      %v955 = vpack.c.bf16 %v909, %v908
      %v956 = vpack.c.bf16 %v911, %v910
      %v957 = vpack.c.bf16 %v913, %v912
      %v958 = vpack.c.bf16 %v915, %v914
      %v959 = vpack.c.bf16 %v917, %v916
      %v960 = vld [vmem:[%s230] sm:$0xff]
      %v961 = vld [vmem:[%s230 + $0x8] sm:$0xff]
      %v962 = vld [vmem:[%s230 + $0x10] sm:$0xff]
      %v963 = vld [vmem:[%s230 + $0x18] sm:$0xff]
      %v964 = vld [vmem:[%s230 + $0x20] sm:$0xff]
      %v965 = vld [vmem:[%s230 + $0x28] sm:$0xff]
      %v966 = vld [vmem:[%s230 + $0x30] sm:$0xff]
      %v967 = vld [vmem:[%s230 + $0x38] sm:$0xff]
      %v968 = vld [vmem:[%s230 + $0x40] sm:$0xff]
      %v969 = vld [vmem:[%s230 + $0x48] sm:$0xff]
      %v970 = vld [vmem:[%s230 + $0x50] sm:$0xff]
      %v971 = vld [vmem:[%s230 + $0x58] sm:$0xff]
      %v972 = vld [vmem:[%s230 + $0x60] sm:$0xff]
      %v973 = vld [vmem:[%s230 + $0x68] sm:$0xff]
      %v974 = vld [vmem:[%s230 + $0x70] sm:$0xff]
      %v975 = vld [vmem:[%s230 + $0x78] sm:$0xff]
      %v976 = vld [vmem:[%s230 + $0x80] sm:$0xff]
      %v977 = vld [vmem:[%s230 + $0x88] sm:$0xff]
      %v978 = vld [vmem:[%s230 + $0x90] sm:$0xff]
      %v979 = vld [vmem:[%s230 + $0x98] sm:$0xff]
      %v980 = vld [vmem:[%s230 + $0xa0] sm:$0xff]
      %v981 = vld [vmem:[%s230 + $0xa8] sm:$0xff]
      %v982 = vld [vmem:[%s230 + $0xb0] sm:$0xff]
      %v983 = vld [vmem:[%s230 + $0xb8] sm:$0xff]
      %v984 = vld [vmem:[%s230 + $0xc0] sm:$0xff]
      %v985 = vld [vmem:[%s230 + $0xc8] sm:$0xff]
      %v986 = vld [vmem:[%s230 + $0xd0] sm:$0xff]
      %v987 = vld [vmem:[%s230 + $0xd8] sm:$0xff]
      %v988 = vld [vmem:[%s230 + $0xe0] sm:$0xff]
      %v989 = vld [vmem:[%s230 + $0xe8] sm:$0xff]
      %v990 = vld [vmem:[%s230 + $0xf0] sm:$0xff]
      %v991 = vld [vmem:[%s230 + $0xf8] sm:$0xff]
      %v992 = vld [vmem:[%s230 + $0x100] sm:$0xff]
      %v993 = vld [vmem:[%s230 + $0x108] sm:$0xff]
      %v994 = vld [vmem:[%s230 + $0x110] sm:$0xff]
      %v995 = vld [vmem:[%s230 + $0x118] sm:$0xff]
      %v1032 = vunpack.c.l.b16 %v960
      %v1033 = vunpack.c.h.b16 %v960
      %v1034 = vunpack.c.l.b16 %v961
      %v1035 = vunpack.c.h.b16 %v961
      %v1036 = vunpack.c.l.b16 %v962
      %v1037 = vunpack.c.h.b16 %v962
      %v1038 = vunpack.c.l.b16 %v963
      %v1039 = vunpack.c.h.b16 %v963
      %v1040 = vunpack.c.l.b16 %v964
      %v1041 = vunpack.c.h.b16 %v964
      %v1042 = vunpack.c.l.b16 %v965
      %v1043 = vunpack.c.h.b16 %v965
      %v1044 = vunpack.c.l.b16 %v966
      %v1045 = vunpack.c.h.b16 %v966
      %v1046 = vunpack.c.l.b16 %v967
      %v1047 = vunpack.c.h.b16 %v967
      %v1048 = vunpack.c.l.b16 %v968
      %v1049 = vunpack.c.h.b16 %v968
      %v1050 = vunpack.c.l.b16 %v969
      %v1051 = vunpack.c.h.b16 %v969
      %v1052 = vunpack.c.l.b16 %v970
      %v1053 = vunpack.c.h.b16 %v970
      %v1054 = vunpack.c.l.b16 %v971
      %v1055 = vunpack.c.h.b16 %v971
      %v1056 = vunpack.c.l.b16 %v972
      %v1057 = vunpack.c.h.b16 %v972
      %v1058 = vunpack.c.l.b16 %v973
      %v1059 = vunpack.c.h.b16 %v973
      %v1060 = vunpack.c.l.b16 %v974
      %v1061 = vunpack.c.h.b16 %v974
      %v1062 = vunpack.c.l.b16 %v975
      %v1063 = vunpack.c.h.b16 %v975
      %v1064 = vunpack.c.l.b16 %v976
      %v1065 = vunpack.c.h.b16 %v976
      %v1066 = vunpack.c.l.b16 %v977
      %v1067 = vunpack.c.h.b16 %v977
      %v1068 = vunpack.c.l.b16 %v978
      %v1069 = vunpack.c.h.b16 %v978
      %v1070 = vunpack.c.l.b16 %v979
      %v1071 = vunpack.c.h.b16 %v979
      %v1072 = vunpack.c.l.b16 %v980
      %v1073 = vunpack.c.h.b16 %v980
      %v1074 = vunpack.c.l.b16 %v981
      %v1075 = vunpack.c.h.b16 %v981
      %v1076 = vunpack.c.l.b16 %v982
      %v1077 = vunpack.c.h.b16 %v982
      %v1078 = vunpack.c.l.b16 %v983
      %v1079 = vunpack.c.h.b16 %v983
      %v1080 = vunpack.c.l.b16 %v984
      %v1081 = vunpack.c.h.b16 %v984
      %v1082 = vunpack.c.l.b16 %v985
      %v1083 = vunpack.c.h.b16 %v985
      %v1084 = vunpack.c.l.b16 %v986
      %v1085 = vunpack.c.h.b16 %v986
      %v1086 = vunpack.c.l.b16 %v987
      %v1087 = vunpack.c.h.b16 %v987
      %v1088 = vunpack.c.l.b16 %v988
      %v1089 = vunpack.c.h.b16 %v988
      %v1090 = vunpack.c.l.b16 %v989
      %v1091 = vunpack.c.h.b16 %v989
      %v1092 = vunpack.c.l.b16 %v990
      %v1093 = vunpack.c.h.b16 %v990
      %v1094 = vunpack.c.l.b16 %v991
      %v1095 = vunpack.c.h.b16 %v991
      %v1096 = vunpack.c.l.b16 %v992
      %v1097 = vunpack.c.h.b16 %v992
      %v1098 = vunpack.c.l.b16 %v993
      %v1099 = vunpack.c.h.b16 %v993
      %v1100 = vunpack.c.l.b16 %v994
      %v1101 = vunpack.c.h.b16 %v994
      %v1102 = vunpack.c.l.b16 %v995
      %v1103 = vunpack.c.h.b16 %v995
      %v1104 = vpack.c.b16 %v1038, %v1032
      %v1105 = vpack.c.b16 %v1039, %v1033
      %v1106 = vpack.c.b16 %v1040, %v1034
      %v1107 = vpack.c.b16 %v1041, %v1035
      %v1108 = vpack.c.b16 %v1042, %v1036
      %v1109 = vpack.c.b16 %v1043, %v1037
      %v1110 = vpack.c.b16 %v1050, %v1044
      %v1111 = vpack.c.b16 %v1051, %v1045
      %v1112 = vpack.c.b16 %v1052, %v1046
      %v1113 = vpack.c.b16 %v1053, %v1047
      %v1114 = vpack.c.b16 %v1054, %v1048
      %v1115 = vpack.c.b16 %v1055, %v1049
      %v1116 = vpack.c.b16 %v1062, %v1056
      %v1117 = vpack.c.b16 %v1063, %v1057
      %v1118 = vpack.c.b16 %v1064, %v1058
      %v1119 = vpack.c.b16 %v1065, %v1059
      %v1120 = vpack.c.b16 %v1066, %v1060
      %v1121 = vpack.c.b16 %v1067, %v1061
      %v1122 = vpack.c.b16 %v1074, %v1068
      %v1123 = vpack.c.b16 %v1075, %v1069
      %v1124 = vpack.c.b16 %v1076, %v1070
      %v1125 = vpack.c.b16 %v1077, %v1071
      %v1126 = vpack.c.b16 %v1078, %v1072
      %v1127 = vpack.c.b16 %v1079, %v1073
      %v1128 = vpack.c.b16 %v1086, %v1080
      %v1129 = vpack.c.b16 %v1087, %v1081
      %v1130 = vpack.c.b16 %v1088, %v1082
      %v1131 = vpack.c.b16 %v1089, %v1083
      %v1132 = vpack.c.b16 %v1090, %v1084
      %v1133 = vpack.c.b16 %v1091, %v1085
      %v1134 = vpack.c.b16 %v1098, %v1092
      %v1135 = vpack.c.b16 %v1099, %v1093
      %v1136 = vpack.c.b16 %v1100, %v1094
      %v1137 = vpack.c.b16 %v1101, %v1095
      %v1138 = vpack.c.b16 %v1102, %v1096
      %v1139 = vpack.c.b16 %v1103, %v1097
      %vm1170 = vcmask 261120
      %v1172 = vsel %vm1170, %v1109, 0
      %v1175 = vsel %vm1170, %v1115, 0
      %v1178 = vsel %vm1170, %v1121, 0
      %v1181 = vsel %vm1170, %v1127, 0
      %v1184 = vsel %vm1170, %v1133, 0
      %v1187 = vsel %vm1170, %v1139, 0
      %1189 = vmatpush.bf16.msra.mxu0 %v925
      %1190 = vmatpush.bf16.msra.mxu0 %v924
      %1191 = vmatpush.bf16.msra.mxu0 %v923
      %1192 = vmatpush.bf16.msra.mxu0 %v922
      %1193 = vmatpush.bf16.msra.mxu0 %v921
      %1194 = vmatpush.bf16.msra.mxu0 %v920
      %1195 = vmatpush.bf16.msra.mxu0 %v919
      %1196 = vmatpush.bf16.msra.mxu0 %v918
      %1197 = vmatmul.bf16.gmra.mxu0 %v1104
      %v1198 = vpop.f32.mrf.mxu0
      %v1199 = vadd.f32 0.0, %v1198
      %v1200 = vpop.f32.mrf.mxu0
      %v1201 = vadd.f32 0.0, %v1200
      %1202 = vmatmul.bf16.gmra.mxu0 %v1110
      %v1203 = vpop.f32.mrf.mxu0
      %v1204 = vadd.f32 0.0, %v1203
      %v1205 = vpop.f32.mrf.mxu0
      %v1206 = vadd.f32 0.0, %v1205
      %1207 = vmatmul.bf16.gmra.mxu0 %v1116
      %v1208 = vpop.f32.mrf.mxu0
      %v1209 = vadd.f32 0.0, %v1208
      %v1210 = vpop.f32.mrf.mxu0
      %v1211 = vadd.f32 0.0, %v1210
      %1212 = vmatmul.bf16.gmra.mxu0 %v1122
      %v1213 = vpop.f32.mrf.mxu0
      %v1214 = vadd.f32 0.0, %v1213
      %v1215 = vpop.f32.mrf.mxu0
      %v1216 = vadd.f32 0.0, %v1215
      %1217 = vmatmul.bf16.gmra.mxu0 %v1128
      %v1218 = vpop.f32.mrf.mxu0
      %v1219 = vadd.f32 0.0, %v1218
      %v1220 = vpop.f32.mrf.mxu0
      %v1221 = vadd.f32 0.0, %v1220
      %1222 = vmatmul.bf16.gmra.mxu0 %v1134
      %v1223 = vpop.f32.mrf.mxu0
      %v1224 = vadd.f32 0.0, %v1223
      %v1225 = vpop.f32.mrf.mxu0
      %v1226 = vadd.f32 0.0, %v1225
      %1227 = vdwg.mxu0
      %1228 = vmatpush.bf16.msra.mxu0 %v933
      %1229 = vmatpush.bf16.msra.mxu0 %v932
      %1230 = vmatpush.bf16.msra.mxu0 %v931
      %1231 = vmatpush.bf16.msra.mxu0 %v930
      %1232 = vmatpush.bf16.msra.mxu0 %v929
      %1233 = vmatpush.bf16.msra.mxu0 %v928
      %1234 = vmatpush.bf16.msra.mxu0 %v927
      %1235 = vmatpush.bf16.msra.mxu0 %v926
      %1236 = vmatmul.bf16.gmra.mxu0 %v1105
      %v1237 = vpop.f32.mrf.mxu0
      %v1238 = vadd.f32 %v1199, %v1237
      %v1239 = vpop.f32.mrf.mxu0
      %v1240 = vadd.f32 %v1201, %v1239
      %1241 = vmatmul.bf16.gmra.mxu0 %v1111
      %v1242 = vpop.f32.mrf.mxu0
      %v1243 = vadd.f32 %v1204, %v1242
      %v1244 = vpop.f32.mrf.mxu0
      %v1245 = vadd.f32 %v1206, %v1244
      %1246 = vmatmul.bf16.gmra.mxu0 %v1117
      %v1247 = vpop.f32.mrf.mxu0
      %v1248 = vadd.f32 %v1209, %v1247
      %v1249 = vpop.f32.mrf.mxu0
      %v1250 = vadd.f32 %v1211, %v1249
      %1251 = vmatmul.bf16.gmra.mxu0 %v1123
      %v1252 = vpop.f32.mrf.mxu0
      %v1253 = vadd.f32 %v1214, %v1252
      %v1254 = vpop.f32.mrf.mxu0
      %v1255 = vadd.f32 %v1216, %v1254
      %1256 = vmatmul.bf16.gmra.mxu0 %v1129
      %v1257 = vpop.f32.mrf.mxu0
      %v1258 = vadd.f32 %v1219, %v1257
      %v1259 = vpop.f32.mrf.mxu0
      %v1260 = vadd.f32 %v1221, %v1259
      %1261 = vmatmul.bf16.gmra.mxu0 %v1135
      %v1262 = vpop.f32.mrf.mxu0
      %v1263 = vadd.f32 %v1224, %v1262
      %v1264 = vpop.f32.mrf.mxu0
      %v1265 = vadd.f32 %v1226, %v1264
      %1266 = vdwg.mxu0
      %1267 = vmatpush.bf16.msra.mxu0 %v941
      %1268 = vmatpush.bf16.msra.mxu0 %v940
      %1269 = vmatpush.bf16.msra.mxu0 %v939
      %1270 = vmatpush.bf16.msra.mxu0 %v938
      %1271 = vmatpush.bf16.msra.mxu0 %v937
      %1272 = vmatpush.bf16.msra.mxu0 %v936
      %1273 = vmatpush.bf16.msra.mxu0 %v935
      %1274 = vmatpush.bf16.msra.mxu0 %v934
      %1275 = vmatmul.bf16.gmra.mxu0 %v1106
      %v1276 = vpop.f32.mrf.mxu0
      %v1277 = vadd.f32 %v1238, %v1276
      %v1278 = vpop.f32.mrf.mxu0
      %v1279 = vadd.f32 %v1240, %v1278
      %1280 = vmatmul.bf16.gmra.mxu0 %v1112
      %v1281 = vpop.f32.mrf.mxu0
      %v1282 = vadd.f32 %v1243, %v1281
      %v1283 = vpop.f32.mrf.mxu0
      %v1284 = vadd.f32 %v1245, %v1283
      %1285 = vmatmul.bf16.gmra.mxu0 %v1118
      %v1286 = vpop.f32.mrf.mxu0
      %v1287 = vadd.f32 %v1248, %v1286
      %v1288 = vpop.f32.mrf.mxu0
      %v1289 = vadd.f32 %v1250, %v1288
      %1290 = vmatmul.bf16.gmra.mxu0 %v1124
      %v1291 = vpop.f32.mrf.mxu0
      %v1292 = vadd.f32 %v1253, %v1291
      %v1293 = vpop.f32.mrf.mxu0
      %v1294 = vadd.f32 %v1255, %v1293
      %1295 = vmatmul.bf16.gmra.mxu0 %v1130
      %v1296 = vpop.f32.mrf.mxu0
      %v1297 = vadd.f32 %v1258, %v1296
      %v1298 = vpop.f32.mrf.mxu0
      %v1299 = vadd.f32 %v1260, %v1298
      %1300 = vmatmul.bf16.gmra.mxu0 %v1136
      %v1301 = vpop.f32.mrf.mxu0
      %v1302 = vadd.f32 %v1263, %v1301
      %v1303 = vpop.f32.mrf.mxu0
      %v1304 = vadd.f32 %v1265, %v1303
      %1305 = vdwg.mxu0
      %1306 = vmatpush.bf16.msra.mxu0 %v949
      %1307 = vmatpush.bf16.msra.mxu0 %v948
      %1308 = vmatpush.bf16.msra.mxu0 %v947
      %1309 = vmatpush.bf16.msra.mxu0 %v946
      %1310 = vmatpush.bf16.msra.mxu0 %v945
      %1311 = vmatpush.bf16.msra.mxu0 %v944
      %1312 = vmatpush.bf16.msra.mxu0 %v943
      %1313 = vmatpush.bf16.msra.mxu0 %v942
      %1314 = vmatmul.bf16.gmra.mxu0 %v1107
      %v1315 = vpop.f32.mrf.mxu0
      %v1316 = vadd.f32 %v1277, %v1315
      %v1317 = vpop.f32.mrf.mxu0
      %v1318 = vadd.f32 %v1279, %v1317
      %1319 = vmatmul.bf16.gmra.mxu0 %v1113
      %v1320 = vpop.f32.mrf.mxu0
      %v1321 = vadd.f32 %v1282, %v1320
      %v1322 = vpop.f32.mrf.mxu0
      %v1323 = vadd.f32 %v1284, %v1322
      %1324 = vmatmul.bf16.gmra.mxu0 %v1119
      %v1325 = vpop.f32.mrf.mxu0
      %v1326 = vadd.f32 %v1287, %v1325
      %v1327 = vpop.f32.mrf.mxu0
      %v1328 = vadd.f32 %v1289, %v1327
      %1329 = vmatmul.bf16.gmra.mxu0 %v1125
      %v1330 = vpop.f32.mrf.mxu0
      %v1331 = vadd.f32 %v1292, %v1330
      %v1332 = vpop.f32.mrf.mxu0
      %v1333 = vadd.f32 %v1294, %v1332
      %1334 = vmatmul.bf16.gmra.mxu0 %v1131
      %v1335 = vpop.f32.mrf.mxu0
      %v1336 = vadd.f32 %v1297, %v1335
      %v1337 = vpop.f32.mrf.mxu0
      %v1338 = vadd.f32 %v1299, %v1337
      %1339 = vmatmul.bf16.gmra.mxu0 %v1137
      %v1340 = vpop.f32.mrf.mxu0
      %v1341 = vadd.f32 %v1302, %v1340
      %v1342 = vpop.f32.mrf.mxu0
      %v1343 = vadd.f32 %v1304, %v1342
      %1344 = vdwg.mxu0
      %1345 = vmatpush.bf16.msra.mxu0 %v957
      %1346 = vmatpush.bf16.msra.mxu0 %v956
      %1347 = vmatpush.bf16.msra.mxu0 %v955
      %1348 = vmatpush.bf16.msra.mxu0 %v954
      %1349 = vmatpush.bf16.msra.mxu0 %v953
      %1350 = vmatpush.bf16.msra.mxu0 %v952
      %1351 = vmatpush.bf16.msra.mxu0 %v951
      %1352 = vmatpush.bf16.msra.mxu0 %v950
      %1353 = vmatmul.bf16.gmra.mxu0 %v1108
      %v1354 = vpop.f32.mrf.mxu0
      %v1355 = vadd.f32 %v1316, %v1354
      %v1356 = vpop.f32.mrf.mxu0
      %v1357 = vadd.f32 %v1318, %v1356
      %1358 = vmatmul.bf16.gmra.mxu0 %v1114
      %v1359 = vpop.f32.mrf.mxu0
      %v1360 = vadd.f32 %v1321, %v1359
      %v1361 = vpop.f32.mrf.mxu0
      %v1362 = vadd.f32 %v1323, %v1361
      %1363 = vmatmul.bf16.gmra.mxu0 %v1120
      %v1364 = vpop.f32.mrf.mxu0
      %v1365 = vadd.f32 %v1326, %v1364
      %v1366 = vpop.f32.mrf.mxu0
      %v1367 = vadd.f32 %v1328, %v1366
      %1368 = vmatmul.bf16.gmra.mxu0 %v1126
      %v1369 = vpop.f32.mrf.mxu0
      %v1370 = vadd.f32 %v1331, %v1369
      %v1371 = vpop.f32.mrf.mxu0
      %v1372 = vadd.f32 %v1333, %v1371
      %1373 = vmatmul.bf16.gmra.mxu0 %v1132
      %v1374 = vpop.f32.mrf.mxu0
      %v1375 = vadd.f32 %v1336, %v1374
      %v1376 = vpop.f32.mrf.mxu0
      %v1377 = vadd.f32 %v1338, %v1376
      %1378 = vmatmul.bf16.gmra.mxu0 %v1138
      %v1379 = vpop.f32.mrf.mxu0
      %v1380 = vadd.f32 %v1341, %v1379
      %v1381 = vpop.f32.mrf.mxu0
      %v1382 = vadd.f32 %v1343, %v1381
      %1383 = vdwg.mxu0
      %1384 = vmatpush.bf16.msra.mxu0 0
      %1385 = vmatpush.bf16.msra.mxu0 0
      %1386 = vmatpush.bf16.msra.mxu0 0
      %1387 = vmatpush.bf16.msra.mxu0 0
      %1388 = vmatpush.bf16.msra.mxu0 0
      %1389 = vmatpush.bf16.msra.mxu0 0
      %1390 = vmatpush.bf16.msra.mxu0 %v959
      %1391 = vmatpush.bf16.msra.mxu0 %v958
      %1392 = vmatmul.bf16.gmra.mxu0 %v1172
      %v1393 = vpop.f32.mrf.mxu0
      %v1394 = vadd.f32 %v1355, %v1393
      %v1395 = vpop.f32.mrf.mxu0
      %v1396 = vadd.f32 %v1357, %v1395
      %1397 = vmatmul.bf16.gmra.mxu0 %v1175
      %v1398 = vpop.f32.mrf.mxu0
      %v1399 = vadd.f32 %v1360, %v1398
      %v1400 = vpop.f32.mrf.mxu0
      %v1401 = vadd.f32 %v1362, %v1400
      %1402 = vmatmul.bf16.gmra.mxu0 %v1178
      %v1403 = vpop.f32.mrf.mxu0
      %v1404 = vadd.f32 %v1365, %v1403
      %v1405 = vpop.f32.mrf.mxu0
      %v1406 = vadd.f32 %v1367, %v1405
      %1407 = vmatmul.bf16.gmra.mxu0 %v1181
      %v1408 = vpop.f32.mrf.mxu0
      %v1409 = vadd.f32 %v1370, %v1408
      %v1410 = vpop.f32.mrf.mxu0
      %v1411 = vadd.f32 %v1372, %v1410
      %1412 = vmatmul.bf16.gmra.mxu0 %v1184
      %v1413 = vpop.f32.mrf.mxu0
      %v1414 = vadd.f32 %v1375, %v1413
      %v1415 = vpop.f32.mrf.mxu0
      %v1416 = vadd.f32 %v1377, %v1415
      %1417 = vmatmul.bf16.gmra.mxu0 %v1187
      %v1418 = vpop.f32.mrf.mxu0
      %v1419 = vadd.f32 %v1380, %v1418
      %v1420 = vpop.f32.mrf.mxu0
      %v1421 = vadd.f32 %v1382, %v1420
      %1422 = vdwg.mxu0
      %vm1423 = vcmask 400384
      %1424 = vst.msk [vmem:[%s243] sm:$0xff] %vm1423, %v1394
      %1425 = vst.msk [vmem:[%s243 + $0x8] sm:$0xff] %vm1423, %v1396
      %1426 = vst.msk [vmem:[%s243 + $0x10] sm:$0xff] %vm1423, %v1399
      %1427 = vst.msk [vmem:[%s243 + $0x18] sm:$0xff] %vm1423, %v1401
      %1428 = vst.msk [vmem:[%s243 + $0x20] sm:$0xff] %vm1423, %v1404
      %1429 = vst.msk [vmem:[%s243 + $0x28] sm:$0xff] %vm1423, %v1406
      %1430 = vst.msk [vmem:[%s243 + $0x30] sm:$0xff] %vm1423, %v1409
      %1431 = vst.msk [vmem:[%s243 + $0x38] sm:$0xff] %vm1423, %v1411
      %1432 = vst.msk [vmem:[%s243 + $0x40] sm:$0xff] %vm1423, %v1414
      %1433 = vst.msk [vmem:[%s243 + $0x48] sm:$0xff] %vm1423, %v1416
      %1434 = vst.msk [vmem:[%s243 + $0x50] sm:$0xff] %vm1423, %v1419
      %1435 = vst.msk [vmem:[%s243 + $0x58] sm:$0xff] %vm1423, %v1421
      %s1436 = smul.u32 12, %s20
      %p1437 = scmp.lt.s32.totalorder %s19, 0
      %s1438 = scalar_select %p1437, %s19, 0
      %p1439 = scmp.lt.s32.totalorder %s1436, 23
      %s1440 = scalar_select %p1439, %s1436, 23
      %p1441 = scmp.lt.s32.totalorder %s21, 0
      %s1442 = scalar_select %p1441, %s21, 0
      %s1443 = sadd.s32 %s1442, %s1440
      %s1444 = smul.addr %s1438, 24
      %s1445 = sadd.s32 %s1443, %s1444
      %s1446 = smul.addr %s1445, 8
      %s1447 = scalar_lea.vmem %s3, %s1446
      // Predicated region
      $region33: #{tpu_custom_call.1} parent=31 // pred_check
        %p1448 = pneg %p130
      $region34: #{tpu_custom_call.1} parent=31 // pred_check_branch
        %1450 = sbr.rel (%p1448) target = $region36
      $region35: #{tpu_custom_call.1} parent=31 // pred_region
        %s1451 = smul.u32 12, %s20
      $region36: #{tpu_custom_call.1} parent=31 // pred_fallthru
        _
    $region32: #{tpu_custom_call.1} parent=5 // pred_fallthru
      _
    %p1452 = scmp.le.s32.totalorder 2, %s9
    // Predicated region
    $region37: #{tpu_custom_call.1} parent=5 // pred_check
      %p1453 = pneg %p1452
    $region38: #{tpu_custom_call.1} parent=5 // pred_check_branch
      %1455 = sbr.rel (%p1453) target = $region40
    $region39: #{tpu_custom_call.1} parent=5 // pred_region
      %s1456 = ssub.s32 %s9, 2
      // Predicated region
      $region41: #{tpu_custom_call.1} parent=39 // pred_check
        %p1457 = pneg %p136
      $region42: #{tpu_custom_call.1} parent=39 // pred_check_branch
        %1459 = sbr.rel (%p1457) target = $region44
      $region43: #{tpu_custom_call.1} parent=39 // pred_region
        %s1460 = smul.u32 12, %s23
        %p1461 = scmp.lt.s32.totalorder %s22, 0
        %s1462 = scalar_select %p1461, %s22, 0
        %p1463 = scmp.lt.s32.totalorder %s1460, 23
        %s1464 = scalar_select %p1463, %s1460, 23
        %p1465 = scmp.lt.s32.totalorder %s24, 0
        %s1466 = scalar_select %p1465, %s24, 0
        %s1467 = sadd.s32 %s1466, %s1464
        %s1468 = smul.addr %s1462, 24
        %s1469 = sadd.s32 %s1467, %s1468
        %s1470 = smul.addr %s1469, 8
        %s1471 = scalar_lea.vmem %s3, %s1470
      $region44: #{tpu_custom_call.1} parent=39 // pred_fallthru
        _
    $region40: #{tpu_custom_call.1} parent=5 // pred_fallthru
      _
  $region6: #{tpu_custom_call.1} parent=0 // loop_footer
    %s13 = sadd.s32 1, %s9
  $region7: #{tpu_custom_call.1} parent=0 // loop_footer_branch
    %8 = sbr.rel target = $region3
  $region8: #{tpu_custom_call.1} parent=0 // loop_exit
    _

</llo_original>
